<compile_context>
chip_gen: v7x
topology: tpu7x:2x2x1
jax: 0.10.0
libtpu: 0.0.40
codegen_flags: <defaults>
</compile_context>

<pallas_src>
import functools
import math

import jax
import jax.numpy as jnp
import numpy as np
from jax.experimental import pallas as pl
from jax.experimental.pallas import tpu as pltpu


def _round_up(x, m):
    return ((x + m - 1) // m) * m


def _gt_layer_kernel(N, Dh, NT, UB, eps,
                     # scalar-prefetch (SMEM)
                     rowptr_ref, src_ref,
                     # dense inputs (VMEM)
                     x_ref, wqkv_ref, bhead_ref, wo_ref, bo_ref,
                     g1_ref, be1_ref, w1_ref, bf1_ref, w2_ref, bf2_ref,
                     g2_ref, be2_ref,
                     # output
                     out_ref,
                     # scratch (VMEM, persistent across grid steps)
                     q_scr, k_scr, v_scr, num_scr, den_scr,
                     numacc_scr, denacc_scr):
    f32 = jnp.float32
    bf16 = jnp.bfloat16
    Np, Dp = q_scr.shape
    pid = pl.program_id(0)

    # -------- prologue: fused QKV projection + accumulator init ------------
    @pl.when(pid == 0)
    def _():
        xb = x_ref[...].astype(bf16)
        qkv = jnp.dot(xb, wqkv_ref[...], preferred_element_type=f32)  # [Np,3Dp]
        inv_sqrt_dh = 1.0 / math.sqrt(Dh)
        q_scr[...] = qkv[:, 0:Dp] * inv_sqrt_dh    # fold 1/sqrt(head_dim) once
        k_scr[...] = qkv[:, Dp:2 * Dp]
        v_scr[...] = qkv[:, 2 * Dp:3 * Dp]
        num_scr[...] = jnp.zeros_like(num_scr)
        den_scr[...] = jnp.zeros_like(den_scr)

    rows_iota = jax.lax.broadcasted_iota(jnp.int32, (UB, 1), 0)   # hoisted

    # -------- message passing: CSR (edges sorted by target), UB-edge tiles --
    @pl.loop(0, NT)
    def _(t_local):
        t = pid * NT + t_local                     # target node row in [0, Np)
        row_start = rowptr_ref[t]
        row_end = rowptr_ref[t + 1]                # padding nodes have deg 0
        q = q_scr[pl.ds(t, 1), :]                  # [1, Dp] f32, pre-scaled

        numacc_scr[...] = jnp.zeros_like(numacc_scr)
        denacc_scr[...] = jnp.zeros_like(denacc_scr)

        @pl.loop(0, pl.cdiv(row_end - row_start, UB))
        def _(it):
            base = row_start + it * UB
            k_rows = []
            v_rows = []
            for j in range(UB):                    # static unroll: UB gathers
                e = base + j
                e_safe = jnp.where(e < row_end, e, row_start)
                s = src_ref[e_safe]
                k_rows.append(k_scr[pl.ds(s, 1), :])
                v_rows.append(v_scr[pl.ds(s, 1), :])
            k_t = jnp.concatenate(k_rows, axis=0)  # [UB, Dp] f32
            v_t = jnp.concatenate(v_rows, axis=0)  # [UB, Dp] f32
            # per-head dot + broadcast over Dh lanes via one MXU matmul
            qk = (q * k_t).astype(bf16)
            scores = jnp.dot(qk, bhead_ref[...], preferred_element_type=f32)
            mask = ((rows_iota + base) < row_end).astype(f32)   # tail edges
            a = jnp.exp(scores) * mask             # [UB, Dp] edge weights
            numacc_scr[...] += a * v_t
            denacc_scr[...] += a

        # single store per target row (no per-edge RMW scatter)
        num_scr[pl.ds(t, 1), :] = jnp.sum(numacc_scr[...], axis=0, keepdims=True)
        den_scr[pl.ds(t, 1), :] = jnp.sum(denacc_scr[...], axis=0, keepdims=True)

    # -------- epilogue: normalize, O-proj, BN1, FFN, BN2 --------------------
    @pl.when(pid == pl.num_programs(0) - 1)
    def _():
        x32 = x_ref[...]
        den = den_scr[...]
        # zero in-degree nodes (den == 0) must produce 0, never NaN
        safe_den = jnp.where(den > 0.0, den, 1.0)
        agg = num_scr[...] / safe_den

        h = jnp.dot(agg.astype(jnp.bfloat16), wo_ref[...],
                    preferred_element_type=f32)
        h = h + bo_ref[...] + x32                      # bias + residual

        # batch-norm statistics over the N real rows only (f32)
        rowm = (jax.lax.broadcasted_iota(jnp.int32, (Np, 1), 0) < N).astype(f32)
        inv_n = 1.0 / N

        mu = jnp.sum(h * rowm, axis=0, keepdims=True) * inv_n
        d = (h - mu) * rowm
        var = jnp.sum(d * d, axis=0, keepdims=True) * inv_n
        h = (h - mu) * jax.lax.rsqrt(var + eps) * g1_ref[...] + be1_ref[...]

        x2 = h
        f1 = jnp.dot(h.astype(jnp.bfloat16), w1_ref[...],
                     preferred_element_type=f32) + bf1_ref[...]
        f1 = jnp.maximum(f1, 0.0)
        f2 = jnp.dot(f1.astype(jnp.bfloat16), w2_ref[...],
                     preferred_element_type=f32) + bf2_ref[...]
        f2 = f2 + x2

        mu2 = jnp.sum(f2 * rowm, axis=0, keepdims=True) * inv_n
        d2 = (f2 - mu2) * rowm
        var2 = jnp.sum(d2 * d2, axis=0, keepdims=True) * inv_n
        out_ref[...] = (f2 - mu2) * jax.lax.rsqrt(var2 + eps) * g2_ref[...] \
            + be2_ref[...]


def graph_transformer_layer(node_feat, edge_index, params, num_heads,
                            *, node_tile=8, edge_unroll=8, eps=1e-5):
    """node_feat: [N, D] f32; edge_index: [2, E] int32 (source, target)."""
    N, D = node_feat.shape
    E = edge_index.shape[1]
    H = num_heads
    assert D % H == 0
    Dh = D // H

    Dp = _round_up(D, 128)          # lane-dense feature dim
    D2p = _round_up(2 * D, 128)     # lane-dense FFN hidden dim
    NT = node_tile                  # target nodes per grid step
    UB = edge_unroll                # edges per inner tile (static unroll)
    Np = _round_up(N, max(8, NT))   # sublane-aligned, NT-divisible node dim
    n_blocks = Np // NT

    bf16 = jnp.bfloat16

    def pad2(a, rows, cols, dtype=jnp.float32):
        a = jnp.asarray(a, jnp.float32)
        return jnp.pad(a, ((0, rows - a.shape[0]),
                           (0, cols - a.shape[1]))).astype(dtype)

    x_p = pad2(node_feat, Np, Dp)
    wq_p = pad2(params["wq"], Dp, Dp, bf16)
    wk_p = pad2(params["wk"], Dp, Dp, bf16)
    wv_p = pad2(params["wv"], Dp, Dp, bf16)
    wqkv_p = jnp.concatenate([wq_p, wk_p, wv_p], axis=1)      # [Dp, 3*Dp] bf16
    wo_p = pad2(params["wo"], Dp, Dp, bf16)
    bo_p = pad2(params["bo"], 1, Dp)
    g1_p = pad2(params["g1"], 1, Dp)
    be1_p = pad2(params["be1"], 1, Dp)
    w1_p = pad2(params["w1"], Dp, D2p, bf16)
    bf1_p = pad2(params["bf1"], 1, D2p)
    w2_p = pad2(params["w2"], D2p, Dp, bf16)
    bf2_p = pad2(params["bf2"], 1, Dp)
    g2_p = pad2(params["g2"], 1, Dp)
    be2_p = pad2(params["be2"], 1, Dp)

    # block-diagonal "per-head sum + broadcast over Dh lanes" matrix (bf16)
    lane = np.arange(Dp)
    head_id = np.where(lane < D, lane // Dh, -1)
    bhead = (head_id[:, None] == head_id[None, :]) & (head_id[:, None] >= 0)
    bhead_p = jnp.asarray(bhead, bf16)

    # CSR by target: sort edges by target, build row pointers.  Padding node
    # rows get empty ranges so the kernel needs no bounds checks.
    src = edge_index[0].astype(jnp.int32)
    tgt = edge_index[1].astype(jnp.int32)
    order = jnp.argsort(tgt)
    src_sorted = src[order]
    if E == 0:
        src_sorted = jnp.zeros((1,), jnp.int32)
    counts = jnp.bincount(tgt, length=N)
    rowptr = jnp.zeros((Np + 1,), jnp.int32)
    rowptr = rowptr.at[1:N + 1].set(jnp.cumsum(counts).astype(jnp.int32))
    rowptr = rowptr.at[N + 1:].set(jnp.int32(E))

    dense_inputs = (x_p, wqkv_p, bhead_p, wo_p, bo_p, g1_p, be1_p,
                    w1_p, bf1_p, w2_p, bf2_p, g2_p, be2_p)

    def _nbytes(a):
        return int(np.prod(a.shape)) * a.dtype.itemsize

    scratch_bytes = 5 * Np * Dp * 4 + 2 * UB * Dp * 4
    io_bytes = sum(_nbytes(a) for a in dense_inputs) + Np * Dp * 4
    vmem_limit = int(min(max(2 * io_bytes + scratch_bytes + (4 << 20),
                             16 << 20), 64 << 20))

    def full_spec(arr):
        # full-array block; index_map ignores grid index + prefetch refs
        return pl.BlockSpec(arr.shape, lambda i, *_: (0,) * arr.ndim)

    kernel = functools.partial(_gt_layer_kernel, N, Dh, NT, UB, eps)

    out_p = pl.pallas_call(
        kernel,
        out_shape=jax.ShapeDtypeStruct((Np, Dp), jnp.float32),
        grid_spec=pltpu.PrefetchScalarGridSpec(
            num_scalar_prefetch=2,               # rowptr, src_sorted -> SMEM
            grid=(n_blocks,),
            in_specs=[full_spec(a) for a in dense_inputs],
            out_specs=pl.BlockSpec((Np, Dp), lambda i, *_: (0, 0)),
            scratch_shapes=[
                pltpu.VMEM((Np, Dp), jnp.float32),   # Q (pre-scaled)
                pltpu.VMEM((Np, Dp), jnp.float32),   # K
                pltpu.VMEM((Np, Dp), jnp.float32),   # V
                pltpu.VMEM((Np, Dp), jnp.float32),   # numerator
                pltpu.VMEM((Np, Dp), jnp.float32),   # denominator
                pltpu.VMEM((UB, Dp), jnp.float32),   # per-target num accum
                pltpu.VMEM((UB, Dp), jnp.float32),   # per-target den accum
            ]),
        compiler_params=pltpu.CompilerParams(
            dimension_semantics=("arbitrary",),      # sequential accumulation
            vmem_limit_bytes=vmem_limit),
    )(rowptr, src_sorted, *dense_inputs)

    return out_p[:N, :D]


def reference_forward(node_feat, edge_index, params, num_heads):
    """Pure-JAX (f32) replica of the PyTorch forward, for verification."""
    N, D = node_feat.shape
    H = num_heads
    Dh = D // H
    Q = (node_feat @ params["wq"]).reshape(N, H, Dh)
    K = (node_feat @ params["wk"]).reshape(N, H, Dh)
    V = (node_feat @ params["wv"]).reshape(N, H, Dh)
    src, tgt = edge_index[0], edge_index[1]
    score = jnp.exp(jnp.sum(Q[tgt] * K[src], -1) / np.sqrt(Dh))     # [E, H]
    sum_a = jnp.zeros((N, H), jnp.float32).at[tgt].add(score)
    norm = score / sum_a[tgt]
    out = jnp.zeros((N, H, Dh), jnp.float32).at[tgt].add(norm[..., None] * V[src])
    out = out.reshape(N, D) @ params["wo"] + params["bo"][0]
    out = out + node_feat

    def bn(x, g, b):
        mu = x.mean(0)
        var = ((x - mu) ** 2).mean(0)
        return (x - mu) / jnp.sqrt(var + 1e-5) * g[0] + b[0]

    out = bn(out, params["g1"], params["be1"])
    x2 = out
    f = jax.nn.relu(out @ params["w1"] + params["bf1"][0]) @ params["w2"] \
        + params["bf2"][0]
    f = f + x2
    return bn(f, params["g2"], params["be2"])


def init_params(key, in_dim, out_dim):
    """nn.Linear-style init; weights stored [in, out] so y = x @ W."""
    keys = jax.random.split(key, 12)

    def lin(k, fan_in, fan_out):
        bound = 1.0 / np.sqrt(fan_in)
        return jax.random.uniform(k, (fan_in, fan_out), jnp.float32, -bound, bound)

    def bias(k, fan_in, fan_out):
        bound = 1.0 / np.sqrt(fan_in)
        return jax.random.uniform(k, (1, fan_out), jnp.float32, -bound, bound)

    return {
        "wq": lin(keys[0], in_dim, out_dim),
        "wk": lin(keys[1], in_dim, out_dim),
        "wv": lin(keys[2], in_dim, out_dim),
        "wo": lin(keys[3], out_dim, out_dim),
        "bo": bias(keys[4], out_dim, out_dim),
        "w1": lin(keys[5], out_dim, 2 * out_dim),
        "bf1": bias(keys[6], out_dim, 2 * out_dim),
        "w2": lin(keys[7], 2 * out_dim, out_dim),
        "bf2": bias(keys[8], 2 * out_dim, out_dim),
        # batch-norm affine params (torch default: gamma=1, beta=0)
        "g1": jnp.ones((1, out_dim), jnp.float32),
        "be1": jnp.zeros((1, out_dim), jnp.float32),
        "g2": jnp.ones((1, out_dim), jnp.float32),
        "be2": jnp.zeros((1, out_dim), jnp.float32),
    }


if __name__ == "__main__":
    # small graph: 8 nodes, 16 edges, in_dim = out_dim = 32, 4 heads
    N, E, D, H = 8, 16, 32, 4
    key = jax.random.PRNGKey(0)
    k_feat, k_src, k_tgt, k_par = jax.random.split(key, 4)

    node_feat = jax.random.normal(k_feat, (N, D), jnp.float32) * 0.5
    edge_index = jnp.stack([
        jax.random.randint(k_src, (E,), 0, N, jnp.int32),
        jax.random.randint(k_tgt, (E,), 0, N, jnp.int32),
    ], axis=0)                                                       # [2, E]
    params = init_params(k_par, D, D)

    out = graph_transformer_layer(node_feat, edge_index, params, H)
    out = jax.block_until_ready(out)

    ref = jax.block_until_ready(reference_forward(node_feat, edge_index, params, H))
    # tolerance accounts for bf16 MXU operands (f32 accumulation / BN / softmax)
    np.testing.assert_allclose(np.asarray(out), np.asarray(ref),
                               rtol=2e-2, atol=2e-2)

    print("KERNEL_OK")
</pallas_src>

<mosaic_0001>
module attributes {stable_mosaic.version = 11 : i64} {
  func.func @_gt_layer_kernel(%arg0: i32, %arg1: memref<9xi32, #tpu.memory_space<smem>>, %arg2: memref<16xi32, #tpu.memory_space<smem>>, %arg3: memref<8x128xf32, #tpu.memory_space<vmem>>, %arg4: memref<128x384xbf16, #tpu.memory_space<vmem>>, %arg5: memref<128x128xbf16, #tpu.memory_space<vmem>>, %arg6: memref<128x128xbf16, #tpu.memory_space<vmem>>, %arg7: memref<1x128xf32, #tpu.memory_space<vmem>>, %arg8: memref<1x128xf32, #tpu.memory_space<vmem>>, %arg9: memref<1x128xf32, #tpu.memory_space<vmem>>, %arg10: memref<128x128xbf16, #tpu.memory_space<vmem>>, %arg11: memref<1x128xf32, #tpu.memory_space<vmem>>, %arg12: memref<128x128xbf16, #tpu.memory_space<vmem>>, %arg13: memref<1x128xf32, #tpu.memory_space<vmem>>, %arg14: memref<1x128xf32, #tpu.memory_space<vmem>>, %arg15: memref<1x128xf32, #tpu.memory_space<vmem>>, %arg16: memref<8x128xf32, #tpu.memory_space<vmem>>, %arg17: memref<8x128xf32, #tpu.memory_space<vmem>>, %arg18: memref<8x128xf32, #tpu.memory_space<vmem>>, %arg19: memref<8x128xf32, #tpu.memory_space<vmem>>, %arg20: memref<8x128xf32, #tpu.memory_space<vmem>>, %arg21: memref<8x128xf32, #tpu.memory_space<vmem>>, %arg22: memref<8x128xf32, #tpu.memory_space<vmem>>, %arg23: memref<8x128xf32, #tpu.memory_space<vmem>>) attributes {dimension_semantics = [#tpu.dimension_semantics<arbitrary>], iteration_bounds = array<i64: 1>, scalar_prefetch = 2 : i64, scratch_operands = 7 : i64, tpu.core_type = #tpu.core_type<tc>, window_params = [{pipeline_mode = #tpu.pipeline_mode<synchronous>, transform_indices = @transform_0, window_bounds = array<i64: 8, 128>}, {pipeline_mode = #tpu.pipeline_mode<synchronous>, transform_indices = @transform_1, window_bounds = array<i64: 128, 384>}, {pipeline_mode = #tpu.pipeline_mode<synchronous>, transform_indices = @transform_2, window_bounds = array<i64: 128, 128>}, {pipeline_mode = #tpu.pipeline_mode<synchronous>, transform_indices = @transform_3, window_bounds = array<i64: 128, 128>}, {pipeline_mode = #tpu.pipeline_mode<synchronous>, transform_indices = @transform_4, window_bounds = array<i64: 1, 128>}, {pipeline_mode = #tpu.pipeline_mode<synchronous>, transform_indices = @transform_5, window_bounds = array<i64: 1, 128>}, {pipeline_mode = #tpu.pipeline_mode<synchronous>, transform_indices = @transform_6, window_bounds = array<i64: 1, 128>}, {pipeline_mode = #tpu.pipeline_mode<synchronous>, transform_indices = @transform_7, window_bounds = array<i64: 128, 128>}, {pipeline_mode = #tpu.pipeline_mode<synchronous>, transform_indices = @transform_8, window_bounds = array<i64: 1, 128>}, {pipeline_mode = #tpu.pipeline_mode<synchronous>, transform_indices = @transform_9, window_bounds = array<i64: 128, 128>}, {pipeline_mode = #tpu.pipeline_mode<synchronous>, transform_indices = @transform_10, window_bounds = array<i64: 1, 128>}, {pipeline_mode = #tpu.pipeline_mode<synchronous>, transform_indices = @transform_11, window_bounds = array<i64: 1, 128>}, {pipeline_mode = #tpu.pipeline_mode<synchronous>, transform_indices = @transform_12, window_bounds = array<i64: 1, 128>}, {pipeline_mode = #tpu.pipeline_mode<synchronous>, transform_indices = @transform_13, window_bounds = array<i64: 8, 128>}]} {
    %c0_i32 = arith.constant 0 : i32
    %0 = arith.cmpi eq, %arg0, %c0_i32 : i32
    %1 = arith.extui %0 : i1 to i32
    %c0_i32_0 = arith.constant 0 : i32
    %2 = arith.cmpi ne, %1, %c0_i32_0 : i32
    scf.if %2 {
      %c0 = arith.constant 0 : index
      %c0_5 = arith.constant 0 : index
      %8 = vector.load %arg3[%c0, %c0_5] : memref<8x128xf32, #tpu.memory_space<vmem>>, vector<8x128xf32>
      %9 = arith.truncf %8 : vector<8x128xf32> to vector<8x128xbf16>
      %c0_6 = arith.constant 0 : index
      %c0_7 = arith.constant 0 : index
      %10 = vector.load %arg4[%c0_6, %c0_7] : memref<128x384xbf16, #tpu.memory_space<vmem>>, vector<128x384xbf16>
      %cst = arith.constant dense<0.000000e+00> : vector<8x384xf32>
      %11 = tpu.matmul %9, %10, %cst {dimension_numbers = #tpu.dot_dimension_numbers<[1], [0], [0], [1], [0, 0, 1, 1], [], []>} : vector<8x128xbf16>, vector<128x384xbf16>, vector<8x384xf32> -> vector<8x384xf32>
      %12 = vector.extract_strided_slice %11 {offsets = [0, 0], sizes = [8, 128], strides = [1, 1]} : vector<8x384xf32> to vector<8x128xf32>
      %cst_8 = arith.constant 0.353553385 : f32
      %13 = vector.broadcast %cst_8 : f32 to vector<8x128xf32>
      %14 = arith.mulf %12, %13 : vector<8x128xf32>
      %c0_9 = arith.constant 0 : index
      %c0_10 = arith.constant 0 : index
      %15 = vector.load %arg17[%c0_9, %c0_10] : memref<8x128xf32, #tpu.memory_space<vmem>>, vector<8x128xf32>
      tpu.vector_store %arg17[%c0_9, %c0_10], %14 {strides = array<i32>} : memref<8x128xf32, #tpu.memory_space<vmem>>, vector<8x128xf32>,
      %16 = vector.extract_strided_slice %11 {offsets = [0, 128], sizes = [8, 128], strides = [1, 1]} : vector<8x384xf32> to vector<8x128xf32>
      %c0_11 = arith.constant 0 : index
      %c0_12 = arith.constant 0 : index
      %17 = vector.load %arg18[%c0_11, %c0_12] : memref<8x128xf32, #tpu.memory_space<vmem>>, vector<8x128xf32>
      tpu.vector_store %arg18[%c0_11, %c0_12], %16 {strides = array<i32>} : memref<8x128xf32, #tpu.memory_space<vmem>>, vector<8x128xf32>,
      %18 = vector.extract_strided_slice %11 {offsets = [0, 256], sizes = [8, 128], strides = [1, 1]} : vector<8x384xf32> to vector<8x128xf32>
      %c0_13 = arith.constant 0 : index
      %c0_14 = arith.constant 0 : index
      %19 = vector.load %arg19[%c0_13, %c0_14] : memref<8x128xf32, #tpu.memory_space<vmem>>, vector<8x128xf32>
      tpu.vector_store %arg19[%c0_13, %c0_14], %18 {strides = array<i32>} : memref<8x128xf32, #tpu.memory_space<vmem>>, vector<8x128xf32>,
      %cst_15 = arith.constant 0.000000e+00 : f32
      %20 = vector.broadcast %cst_15 : f32 to vector<8x128xf32>
      %c0_16 = arith.constant 0 : index
      %c0_17 = arith.constant 0 : index
      %21 = vector.load %arg20[%c0_16, %c0_17] : memref<8x128xf32, #tpu.memory_space<vmem>>, vector<8x128xf32>
      tpu.vector_store %arg20[%c0_16, %c0_17], %20 {strides = array<i32>} : memref<8x128xf32, #tpu.memory_space<vmem>>, vector<8x128xf32>,
      %cst_18 = arith.constant 0.000000e+00 : f32
      %22 = vector.broadcast %cst_18 : f32 to vector<8x128xf32>
      %c0_19 = arith.constant 0 : index
      %c0_20 = arith.constant 0 : index
      %23 = vector.load %arg21[%c0_19, %c0_20] : memref<8x128xf32, #tpu.memory_space<vmem>>, vector<8x128xf32>
      tpu.vector_store %arg21[%c0_19, %c0_20], %22 {strides = array<i32>} : memref<8x128xf32, #tpu.memory_space<vmem>>, vector<8x128xf32>,
    } else {
    }
    %3 = tpu.iota {dimensions = array<i32: 0>} : vector<8x1xi32>
    %c0_i32_1 = arith.constant 0 : i32
    %c8_i32 = arith.constant 8 : i32
    %4 = arith.addi %c0_i32_1, %c8_i32 : i32
    %c1_i32 = arith.constant 1 : i32
    scf.for %arg24 = %c0_i32_1 to %4 step %c1_i32  : i32 {
      %c1_i32_5 = arith.constant 1 : i32
      %8 = arith.muli %arg24, %c1_i32_5 : i32
      %c0_i32_6 = arith.constant 0 : i32
      %9 = arith.addi %c0_i32_6, %8 : i32
      %c8_i32_7 = arith.constant 8 : i32
      %10 = arith.muli %arg0, %c8_i32_7 : i32
      %11 = arith.addi %10, %9 : i32
      %12 = arith.index_cast %11 : i32 to index
      %13 = memref.load %arg1[%12] : memref<9xi32, #tpu.memory_space<smem>>
      %c1_i32_8 = arith.constant 1 : i32
      %14 = arith.addi %11, %c1_i32_8 : i32
      %15 = arith.index_cast %14 : i32 to index
      %16 = memref.load %arg1[%15] : memref<9xi32, #tpu.memory_space<smem>>
      %17 = arith.index_cast %11 : i32 to index
      %c0 = arith.constant 0 : index
      %18 = vector.load %arg17[%17, %c0] : memref<8x128xf32, #tpu.memory_space<vmem>>, vector<1x128xf32>
      %cst = arith.constant 0.000000e+00 : f32
      %19 = vector.broadcast %cst : f32 to vector<8x128xf32>
      %c0_9 = arith.constant 0 : index
      %c0_10 = arith.constant 0 : index
      %20 = vector.load %arg22[%c0_9, %c0_10] : memref<8x128xf32, #tpu.memory_space<vmem>>, vector<8x128xf32>
      tpu.vector_store %arg22[%c0_9, %c0_10], %19 {strides = array<i32>} : memref<8x128xf32, #tpu.memory_space<vmem>>, vector<8x128xf32>,
      %cst_11 = arith.constant 0.000000e+00 : f32
      %21 = vector.broadcast %cst_11 : f32 to vector<8x128xf32>
      %c0_12 = arith.constant 0 : index
      %c0_13 = arith.constant 0 : index
      %22 = vector.load %arg23[%c0_12, %c0_13] : memref<8x128xf32, #tpu.memory_space<vmem>>, vector<8x128xf32>
      tpu.vector_store %arg23[%c0_12, %c0_13], %21 {strides = array<i32>} : memref<8x128xf32, #tpu.memory_space<vmem>>, vector<8x128xf32>,
      %23 = arith.subi %16, %13 : i32
      %c7_i32 = arith.constant 7 : i32
      %24 = arith.addi %23, %c7_i32 : i32
      %c8_i32_14 = arith.constant 8 : i32
      %25 = arith.divsi %24, %c8_i32_14 : i32
      %c0_i32_15 = arith.constant 0 : i32
      %26 = arith.subi %25, %c0_i32_15 : i32
      %c1_i32_16 = arith.constant 1 : i32
      %c1_i32_17 = arith.constant 1 : i32
      %27 = arith.subi %c1_i32_16, %c1_i32_17 : i32
      %28 = arith.addi %26, %27 : i32
      %c1_i32_18 = arith.constant 1 : i32
      %29 = arith.divsi %28, %c1_i32_18 : i32
      %c1_i32_19 = arith.constant 1 : i32
      %c0_i32_20 = arith.constant 0 : i32
      %c0_i32_21 = arith.constant 0 : i32
      %30 = arith.subi %29, %c0_i32_21 : i32
      %31 = arith.addi %c0_i32_21, %30 : i32
      %c1_i32_22 = arith.constant 1 : i32
      scf.for %arg25 = %c0_i32_21 to %31 step %c1_i32_22  : i32 {
        %42 = arith.muli %arg25, %c1_i32_19 : i32
        %43 = arith.addi %c0_i32_20, %42 : i32
        %c8_i32_31 = arith.constant 8 : i32
        %44 = arith.muli %43, %c8_i32_31 : i32
        %45 = arith.addi %13, %44 : i32
        %c0_i32_32 = arith.constant 0 : i32
        %46 = arith.addi %45, %c0_i32_32 : i32
        %47 = arith.cmpi slt, %46, %16 : i32
        %48 = arith.select %47, %46, %13 : i32
        %49 = arith.index_cast %48 : i32 to index
        %50 = memref.load %arg2[%49] : memref<16xi32, #tpu.memory_space<smem>>
        %51 = arith.index_cast %50 : i32 to index
        %c0_33 = arith.constant 0 : index
        %52 = vector.load %arg18[%51, %c0_33] : memref<8x128xf32, #tpu.memory_space<vmem>>, vector<1x128xf32>
        %53 = arith.index_cast %50 : i32 to index
        %c0_34 = arith.constant 0 : index
        %54 = vector.load %arg19[%53, %c0_34] : memref<8x128xf32, #tpu.memory_space<vmem>>, vector<1x128xf32>
        %c1_i32_35 = arith.constant 1 : i32
        %55 = arith.addi %45, %c1_i32_35 : i32
        %56 = arith.cmpi slt, %55, %16 : i32
        %57 = arith.select %56, %55, %13 : i32
        %58 = arith.index_cast %57 : i32 to index
        %59 = memref.load %arg2[%58] : memref<16xi32, #tpu.memory_space<smem>>
        %60 = arith.index_cast %59 : i32 to index
        %c0_36 = arith.constant 0 : index
        %61 = vector.load %arg18[%60, %c0_36] : memref<8x128xf32, #tpu.memory_space<vmem>>, vector<1x128xf32>
        %62 = arith.index_cast %59 : i32 to index
        %c0_37 = arith.constant 0 : index
        %63 = vector.load %arg19[%62, %c0_37] : memref<8x128xf32, #tpu.memory_space<vmem>>, vector<1x128xf32>
        %c2_i32 = arith.constant 2 : i32
        %64 = arith.addi %45, %c2_i32 : i32
        %65 = arith.cmpi slt, %64, %16 : i32
        %66 = arith.select %65, %64, %13 : i32
        %67 = arith.index_cast %66 : i32 to index
        %68 = memref.load %arg2[%67] : memref<16xi32, #tpu.memory_space<smem>>
        %69 = arith.index_cast %68 : i32 to index
        %c0_38 = arith.constant 0 : index
        %70 = vector.load %arg18[%69, %c0_38] : memref<8x128xf32, #tpu.memory_space<vmem>>, vector<1x128xf32>
        %71 = arith.index_cast %68 : i32 to index
        %c0_39 = arith.constant 0 : index
        %72 = vector.load %arg19[%71, %c0_39] : memref<8x128xf32, #tpu.memory_space<vmem>>, vector<1x128xf32>
        %c3_i32 = arith.constant 3 : i32
        %73 = arith.addi %45, %c3_i32 : i32
        %74 = arith.cmpi slt, %73, %16 : i32
        %75 = arith.select %74, %73, %13 : i32
        %76 = arith.index_cast %75 : i32 to index
        %77 = memref.load %arg2[%76] : memref<16xi32, #tpu.memory_space<smem>>
        %78 = arith.index_cast %77 : i32 to index
        %c0_40 = arith.constant 0 : index
        %79 = vector.load %arg18[%78, %c0_40] : memref<8x128xf32, #tpu.memory_space<vmem>>, vector<1x128xf32>
        %80 = arith.index_cast %77 : i32 to index
        %c0_41 = arith.constant 0 : index
        %81 = vector.load %arg19[%80, %c0_41] : memref<8x128xf32, #tpu.memory_space<vmem>>, vector<1x128xf32>
        %c4_i32 = arith.constant 4 : i32
        %82 = arith.addi %45, %c4_i32 : i32
        %83 = arith.cmpi slt, %82, %16 : i32
        %84 = arith.select %83, %82, %13 : i32
        %85 = arith.index_cast %84 : i32 to index
        %86 = memref.load %arg2[%85] : memref<16xi32, #tpu.memory_space<smem>>
        %87 = arith.index_cast %86 : i32 to index
        %c0_42 = arith.constant 0 : index
        %88 = vector.load %arg18[%87, %c0_42] : memref<8x128xf32, #tpu.memory_space<vmem>>, vector<1x128xf32>
        %89 = arith.index_cast %86 : i32 to index
        %c0_43 = arith.constant 0 : index
        %90 = vector.load %arg19[%89, %c0_43] : memref<8x128xf32, #tpu.memory_space<vmem>>, vector<1x128xf32>
        %c5_i32 = arith.constant 5 : i32
        %91 = arith.addi %45, %c5_i32 : i32
        %92 = arith.cmpi slt, %91, %16 : i32
        %93 = arith.select %92, %91, %13 : i32
        %94 = arith.index_cast %93 : i32 to index
        %95 = memref.load %arg2[%94] : memref<16xi32, #tpu.memory_space<smem>>
        %96 = arith.index_cast %95 : i32 to index
        %c0_44 = arith.constant 0 : index
        %97 = vector.load %arg18[%96, %c0_44] : memref<8x128xf32, #tpu.memory_space<vmem>>, vector<1x128xf32>
        %98 = arith.index_cast %95 : i32 to index
        %c0_45 = arith.constant 0 : index
        %99 = vector.load %arg19[%98, %c0_45] : memref<8x128xf32, #tpu.memory_space<vmem>>, vector<1x128xf32>
        %c6_i32 = arith.constant 6 : i32
        %100 = arith.addi %45, %c6_i32 : i32
        %101 = arith.cmpi slt, %100, %16 : i32
        %102 = arith.select %101, %100, %13 : i32
        %103 = arith.index_cast %102 : i32 to index
        %104 = memref.load %arg2[%103] : memref<16xi32, #tpu.memory_space<smem>>
        %105 = arith.index_cast %104 : i32 to index
        %c0_46 = arith.constant 0 : index
        %106 = vector.load %arg18[%105, %c0_46] : memref<8x128xf32, #tpu.memory_space<vmem>>, vector<1x128xf32>
        %107 = arith.index_cast %104 : i32 to index
        %c0_47 = arith.constant 0 : index
        %108 = vector.load %arg19[%107, %c0_47] : memref<8x128xf32, #tpu.memory_space<vmem>>, vector<1x128xf32>
        %c7_i32_48 = arith.constant 7 : i32
        %109 = arith.addi %45, %c7_i32_48 : i32
        %110 = arith.cmpi slt, %109, %16 : i32
        %111 = arith.select %110, %109, %13 : i32
        %112 = arith.index_cast %111 : i32 to index
        %113 = memref.load %arg2[%112] : memref<16xi32, #tpu.memory_space<smem>>
        %114 = arith.index_cast %113 : i32 to index
        %c0_49 = arith.constant 0 : index
        %115 = vector.load %arg18[%114, %c0_49] : memref<8x128xf32, #tpu.memory_space<vmem>>, vector<1x128xf32>
        %116 = arith.index_cast %113 : i32 to index
        %c0_50 = arith.constant 0 : index
        %117 = vector.load %arg19[%116, %c0_50] : memref<8x128xf32, #tpu.memory_space<vmem>>, vector<1x128xf32>
        %118 = tpu.concatenate %52, %61, %70, %79, %88, %97, %106, %115 in 0 : vector<1x128xf32>, vector<1x128xf32>, vector<1x128xf32>, vector<1x128xf32>, vector<1x128xf32>, vector<1x128xf32>, vector<1x128xf32>, vector<1x128xf32> -> vector<8x128xf32>
        %119 = tpu.concatenate %54, %63, %72, %81, %90, %99, %108, %117 in 0 : vector<1x128xf32>, vector<1x128xf32>, vector<1x128xf32>, vector<1x128xf32>, vector<1x128xf32>, vector<1x128xf32>, vector<1x128xf32>, vector<1x128xf32> -> vector<8x128xf32>
        %120 = vector.broadcast %18 : vector<1x128xf32> to vector<8x128xf32>
        %121 = arith.mulf %120, %118 : vector<8x128xf32>
        %122 = arith.truncf %121 : vector<8x128xf32> to vector<8x128xbf16>
        %c0_51 = arith.constant 0 : index
        %c0_52 = arith.constant 0 : index
        %123 = vector.load %arg5[%c0_51, %c0_52] : memref<128x128xbf16, #tpu.memory_space<vmem>>, vector<128x128xbf16>
        %cst_53 = arith.constant dense<0.000000e+00> : vector<8x128xf32>
        %124 = tpu.matmul %122, %123, %cst_53 {dimension_numbers = #tpu.dot_dimension_numbers<[1], [0], [0], [1], [0, 0, 1, 1], [], []>} : vector<8x128xbf16>, vector<128x128xbf16>, vector<8x128xf32> -> vector<8x128xf32>
        %125 = vector.broadcast %45 : i32 to vector<8x1xi32>
        %126 = arith.addi %3, %125 : vector<8x1xi32>
        %127 = vector.broadcast %16 : i32 to vector<8x1xi32>
        %128 = arith.cmpi slt, %126, %127 : vector<8x1xi32>
        %129 = arith.extui %128 : vector<8x1xi1> to vector<8x1xi32>
        %130 = arith.sitofp %129 : vector<8x1xi32> to vector<8x1xf32>
        %131 = math.exp %124 : vector<8x128xf32>
        %132 = vector.broadcast %130 : vector<8x1xf32> to vector<8x128xf32>
        %133 = arith.mulf %131, %132 : vector<8x128xf32>
        %c0_54 = arith.constant 0 : index
        %c0_55 = arith.constant 0 : index
        %134 = vector.load %arg22[%c0_54, %c0_55] : memref<8x128xf32, #tpu.memory_space<vmem>>, vector<8x128xf32>
        %135 = arith.mulf %133, %119 : vector<8x128xf32>
        %136 = arith.addf %134, %135 : vector<8x128xf32>
        %c0_56 = arith.constant 0 : index
        %c0_57 = arith.constant 0 : index
        %137 = vector.load %arg22[%c0_56, %c0_57] : memref<8x128xf32, #tpu.memory_space<vmem>>, vector<8x128xf32>
        tpu.vector_store %arg22[%c0_56, %c0_57], %136 {strides = array<i32>} : memref<8x128xf32, #tpu.memory_space<vmem>>, vector<8x128xf32>,
        %c0_58 = arith.constant 0 : index
        %c0_59 = arith.constant 0 : index
        %138 = vector.load %arg23[%c0_58, %c0_59] : memref<8x128xf32, #tpu.memory_space<vmem>>, vector<8x128xf32>
        %139 = arith.addf %138, %133 : vector<8x128xf32>
        %c0_60 = arith.constant 0 : index
        %c0_61 = arith.constant 0 : index
        %140 = vector.load %arg23[%c0_60, %c0_61] : memref<8x128xf32, #tpu.memory_space<vmem>>, vector<8x128xf32>
        tpu.vector_store %arg23[%c0_60, %c0_61], %139 {strides = array<i32>} : memref<8x128xf32, #tpu.memory_space<vmem>>, vector<8x128xf32>,
      }
      %c0_23 = arith.constant 0 : index
      %c0_24 = arith.constant 0 : index
      %32 = vector.load %arg22[%c0_23, %c0_24] : memref<8x128xf32, #tpu.memory_space<vmem>>, vector<8x128xf32>
      %cst_25 = arith.constant dense<0.000000e+00> : vector<128xf32>
      %33 = vector.multi_reduction <add>, %32, %cst_25 [0] : vector<8x128xf32> to vector<128xf32>
      %34 = vector.shape_cast %33 : vector<128xf32> to vector<1x128xf32>
      %35 = arith.index_cast %11 : i32 to index
      %c0_26 = arith.constant 0 : index
      %36 = vector.load %arg20[%35, %c0_26] : memref<8x128xf32, #tpu.memory_space<vmem>>, vector<1x128xf32>
      tpu.vector_store %arg20[%35, %c0_26], %34 {strides = array<i32>} : memref<8x128xf32, #tpu.memory_space<vmem>>, vector<1x128xf32>,
      %c0_27 = arith.constant 0 : index
      %c0_28 = arith.constant 0 : index
      %37 = vector.load %arg23[%c0_27, %c0_28] : memref<8x128xf32, #tpu.memory_space<vmem>>, vector<8x128xf32>
      %cst_29 = arith.constant dense<0.000000e+00> : vector<128xf32>
      %38 = vector.multi_reduction <add>, %37, %cst_29 [0] : vector<8x128xf32> to vector<128xf32>
      %39 = vector.shape_cast %38 : vector<128xf32> to vector<1x128xf32>
      %40 = arith.index_cast %11 : i32 to index
      %c0_30 = arith.constant 0 : index
      %41 = vector.load %arg21[%40, %c0_30] : memref<8x128xf32, #tpu.memory_space<vmem>>, vector<1x128xf32>
      tpu.vector_store %arg21[%40, %c0_30], %39 {strides = array<i32>} : memref<8x128xf32, #tpu.memory_space<vmem>>, vector<1x128xf32>,
    }
    %c8_i32_2 = arith.constant 8 : i32
    %c0_i32_3 = arith.constant 0 : i32
    %5 = arith.cmpi eq, %arg0, %c0_i32_3 : i32
    %6 = arith.extui %5 : i1 to i32
    %c0_i32_4 = arith.constant 0 : i32
    %7 = arith.cmpi ne, %6, %c0_i32_4 : i32
    scf.if %7 {
      %c0 = arith.constant 0 : index
      %c0_5 = arith.constant 0 : index
      %8 = vector.load %arg3[%c0, %c0_5] : memref<8x128xf32, #tpu.memory_space<vmem>>, vector<8x128xf32>
      %c0_6 = arith.constant 0 : index
      %c0_7 = arith.constant 0 : index
      %9 = vector.load %arg21[%c0_6, %c0_7] : memref<8x128xf32, #tpu.memory_space<vmem>>, vector<8x128xf32>
      %cst = arith.constant 0.000000e+00 : f32
      %10 = vector.broadcast %cst : f32 to vector<8x128xf32>
      %11 = arith.cmpf ogt, %9, %10 : vector<8x128xf32>
      %cst_8 = arith.constant 1.000000e+00 : f32
      %12 = vector.broadcast %cst_8 : f32 to vector<8x128xf32>
      %13 = arith.select %11, %9, %12 : vector<8x128xi1>, vector<8x128xf32>
      %c0_9 = arith.constant 0 : index
      %c0_10 = arith.constant 0 : index
      %14 = vector.load %arg20[%c0_9, %c0_10] : memref<8x128xf32, #tpu.memory_space<vmem>>, vector<8x128xf32>
      %15 = arith.divf %14, %13 : vector<8x128xf32>
      %16 = arith.truncf %15 : vector<8x128xf32> to vector<8x128xbf16>
      %c0_11 = arith.constant 0 : index
      %c0_12 = arith.constant 0 : index
      %17 = vector.load %arg6[%c0_11, %c0_12] : memref<128x128xbf16, #tpu.memory_space<vmem>>, vector<128x128xbf16>
      %cst_13 = arith.constant dense<0.000000e+00> : vector<8x128xf32>
      %18 = tpu.matmul %16, %17, %cst_13 {dimension_numbers = #tpu.dot_dimension_numbers<[1], [0], [0], [1], [0, 0, 1, 1], [], []>} : vector<8x128xbf16>, vector<128x128xbf16>, vector<8x128xf32> -> vector<8x128xf32>
      %c0_14 = arith.constant 0 : index
      %c0_15 = arith.constant 0 : index
      %19 = vector.load %arg7[%c0_14, %c0_15] : memref<1x128xf32, #tpu.memory_space<vmem>>, vector<1x128xf32>
      %20 = vector.broadcast %19 : vector<1x128xf32> to vector<8x128xf32>
      %21 = arith.addf %18, %20 : vector<8x128xf32>
      %22 = arith.addf %21, %8 : vector<8x128xf32>
      %23 = tpu.iota {dimensions = array<i32: 0>} : vector<8x1xi32>
      %c8_i32_16 = arith.constant 8 : i32
      %24 = vector.broadcast %c8_i32_16 : i32 to vector<8x1xi32>
      %25 = arith.cmpi slt, %23, %24 : vector<8x1xi32>
      %26 = arith.extui %25 : vector<8x1xi1> to vector<8x1xi32>
      %27 = arith.sitofp %26 : vector<8x1xi32> to vector<8x1xf32>
      %28 = vector.broadcast %27 : vector<8x1xf32> to vector<8x128xf32>
      %29 = arith.mulf %22, %28 : vector<8x128xf32>
      %cst_17 = arith.constant dense<0.000000e+00> : vector<128xf32>
      %30 = vector.multi_reduction <add>, %29, %cst_17 [0] : vector<8x128xf32> to vector<128xf32>
      %31 = vector.shape_cast %30 : vector<128xf32> to vector<1x128xf32>
      %cst_18 = arith.constant 1.250000e-01 : f32
      %32 = vector.broadcast %cst_18 : f32 to vector<1x128xf32>
      %33 = arith.mulf %31, %32 : vector<1x128xf32>
      %34 = vector.broadcast %33 : vector<1x128xf32> to vector<8x128xf32>
      %35 = arith.subf %22, %34 : vector<8x128xf32>
      %36 = vector.broadcast %27 : vector<8x1xf32> to vector<8x128xf32>
      %37 = arith.mulf %35, %36 : vector<8x128xf32>
      %38 = arith.mulf %37, %37 : vector<8x128xf32>
      %cst_19 = arith.constant dense<0.000000e+00> : vector<128xf32>
      %39 = vector.multi_reduction <add>, %38, %cst_19 [0] : vector<8x128xf32> to vector<128xf32>
      %40 = vector.shape_cast %39 : vector<128xf32> to vector<1x128xf32>
      %cst_20 = arith.constant 1.250000e-01 : f32
      %41 = vector.broadcast %cst_20 : f32 to vector<1x128xf32>
      %42 = arith.mulf %40, %41 : vector<1x128xf32>
      %43 = vector.broadcast %33 : vector<1x128xf32> to vector<8x128xf32>
      %44 = arith.subf %22, %43 : vector<8x128xf32>
      %cst_21 = arith.constant 9.99999974E-6 : f32
      %45 = vector.broadcast %cst_21 : f32 to vector<1x128xf32>
      %46 = arith.addf %42, %45 : vector<1x128xf32>
      %47 = math.rsqrt %46 : vector<1x128xf32>
      %48 = vector.broadcast %47 : vector<1x128xf32> to vector<8x128xf32>
      %49 = arith.mulf %44, %48 : vector<8x128xf32>
      %c0_22 = arith.constant 0 : index
      %c0_23 = arith.constant 0 : index
      %50 = vector.load %arg8[%c0_22, %c0_23] : memref<1x128xf32, #tpu.memory_space<vmem>>, vector<1x128xf32>
      %51 = vector.broadcast %50 : vector<1x128xf32> to vector<8x128xf32>
      %52 = arith.mulf %49, %51 : vector<8x128xf32>
      %c0_24 = arith.constant 0 : index
      %c0_25 = arith.constant 0 : index
      %53 = vector.load %arg9[%c0_24, %c0_25] : memref<1x128xf32, #tpu.memory_space<vmem>>, vector<1x128xf32>
      %54 = vector.broadcast %53 : vector<1x128xf32> to vector<8x128xf32>
      %55 = arith.addf %52, %54 : vector<8x128xf32>
      %56 = arith.truncf %55 : vector<8x128xf32> to vector<8x128xbf16>
      %c0_26 = arith.constant 0 : index
      %c0_27 = arith.constant 0 : index
      %57 = vector.load %arg10[%c0_26, %c0_27] : memref<128x128xbf16, #tpu.memory_space<vmem>>, vector<128x128xbf16>
      %cst_28 = arith.constant dense<0.000000e+00> : vector<8x128xf32>
      %58 = tpu.matmul %56, %57, %cst_28 {dimension_numbers = #tpu.dot_dimension_numbers<[1], [0], [0], [1], [0, 0, 1, 1], [], []>} : vector<8x128xbf16>, vector<128x128xbf16>, vector<8x128xf32> -> vector<8x128xf32>
      %c0_29 = arith.constant 0 : index
      %c0_30 = arith.constant 0 : index
      %59 = vector.load %arg11[%c0_29, %c0_30] : memref<1x128xf32, #tpu.memory_space<vmem>>, vector<1x128xf32>
      %60 = vector.broadcast %59 : vector<1x128xf32> to vector<8x128xf32>
      %61 = arith.addf %58, %60 : vector<8x128xf32>
      %cst_31 = arith.constant 0.000000e+00 : f32
      %62 = vector.broadcast %cst_31 : f32 to vector<8x128xf32>
      %63 = arith.maximumf %61, %62 : vector<8x128xf32>
      %64 = arith.truncf %63 : vector<8x128xf32> to vector<8x128xbf16>
      %c0_32 = arith.constant 0 : index
      %c0_33 = arith.constant 0 : index
      %65 = vector.load %arg12[%c0_32, %c0_33] : memref<128x128xbf16, #tpu.memory_space<vmem>>, vector<128x128xbf16>
      %cst_34 = arith.constant dense<0.000000e+00> : vector<8x128xf32>
      %66 = tpu.matmul %64, %65, %cst_34 {dimension_numbers = #tpu.dot_dimension_numbers<[1], [0], [0], [1], [0, 0, 1, 1], [], []>} : vector<8x128xbf16>, vector<128x128xbf16>, vector<8x128xf32> -> vector<8x128xf32>
      %c0_35 = arith.constant 0 : index
      %c0_36 = arith.constant 0 : index
      %67 = vector.load %arg13[%c0_35, %c0_36] : memref<1x128xf32, #tpu.memory_space<vmem>>, vector<1x128xf32>
      %68 = vector.broadcast %67 : vector<1x128xf32> to vector<8x128xf32>
      %69 = arith.addf %66, %68 : vector<8x128xf32>
      %70 = arith.addf %69, %55 : vector<8x128xf32>
      %71 = vector.broadcast %27 : vector<8x1xf32> to vector<8x128xf32>
      %72 = arith.mulf %70, %71 : vector<8x128xf32>
      %cst_37 = arith.constant dense<0.000000e+00> : vector<128xf32>
      %73 = vector.multi_reduction <add>, %72, %cst_37 [0] : vector<8x128xf32> to vector<128xf32>
      %74 = vector.shape_cast %73 : vector<128xf32> to vector<1x128xf32>
      %cst_38 = arith.constant 1.250000e-01 : f32
      %75 = vector.broadcast %cst_38 : f32 to vector<1x128xf32>
      %76 = arith.mulf %74, %75 : vector<1x128xf32>
      %77 = vector.broadcast %76 : vector<1x128xf32> to vector<8x128xf32>
      %78 = arith.subf %70, %77 : vector<8x128xf32>
      %79 = vector.broadcast %27 : vector<8x1xf32> to vector<8x128xf32>
      %80 = arith.mulf %78, %79 : vector<8x128xf32>
      %81 = arith.mulf %80, %80 : vector<8x128xf32>
      %cst_39 = arith.constant dense<0.000000e+00> : vector<128xf32>
      %82 = vector.multi_reduction <add>, %81, %cst_39 [0] : vector<8x128xf32> to vector<128xf32>
      %83 = vector.shape_cast %82 : vector<128xf32> to vector<1x128xf32>
      %cst_40 = arith.constant 1.250000e-01 : f32
      %84 = vector.broadcast %cst_40 : f32 to vector<1x128xf32>
      %85 = arith.mulf %83, %84 : vector<1x128xf32>
      %86 = vector.broadcast %76 : vector<1x128xf32> to vector<8x128xf32>
      %87 = arith.subf %70, %86 : vector<8x128xf32>
      %cst_41 = arith.constant 9.99999974E-6 : f32
      %88 = vector.broadcast %cst_41 : f32 to vector<1x128xf32>
      %89 = arith.addf %85, %88 : vector<1x128xf32>
      %90 = math.rsqrt %89 : vector<1x128xf32>
      %91 = vector.broadcast %90 : vector<1x128xf32> to vector<8x128xf32>
      %92 = arith.mulf %87, %91 : vector<8x128xf32>
      %c0_42 = arith.constant 0 : index
      %c0_43 = arith.constant 0 : index
      %93 = vector.load %arg14[%c0_42, %c0_43] : memref<1x128xf32, #tpu.memory_space<vmem>>, vector<1x128xf32>
      %94 = vector.broadcast %93 : vector<1x128xf32> to vector<8x128xf32>
      %95 = arith.mulf %92, %94 : vector<8x128xf32>
      %c0_44 = arith.constant 0 : index
      %c0_45 = arith.constant 0 : index
      %96 = vector.load %arg15[%c0_44, %c0_45] : memref<1x128xf32, #tpu.memory_space<vmem>>, vector<1x128xf32>
      %97 = vector.broadcast %96 : vector<1x128xf32> to vector<8x128xf32>
      %98 = arith.addf %95, %97 : vector<8x128xf32>
      %c0_46 = arith.constant 0 : index
      %c0_47 = arith.constant 0 : index
      %99 = vector.load %arg16[%c0_46, %c0_47] : memref<8x128xf32, #tpu.memory_space<vmem>>, vector<8x128xf32>
      tpu.vector_store %arg16[%c0_46, %c0_47], %98 {strides = array<i32>} : memref<8x128xf32, #tpu.memory_space<vmem>>, vector<8x128xf32>,
    } else {
    }
    return
  }
  func.func @transform_0(%arg0: i32, %arg1: memref<9xi32, #tpu.memory_space<smem>>, %arg2: memref<16xi32, #tpu.memory_space<smem>>) -> (i32, i32) {
    %c0_i32 = arith.constant 0 : i32
    %c0_i32_0 = arith.constant 0 : i32
    %c0_i32_1 = arith.constant 0 : i32
    return %c0_i32, %c0_i32_0 : i32, i32
  }
  func.func @transform_1(%arg0: i32, %arg1: memref<9xi32, #tpu.memory_space<smem>>, %arg2: memref<16xi32, #tpu.memory_space<smem>>) -> (i32, i32) {
    %c0_i32 = arith.constant 0 : i32
    %c0_i32_0 = arith.constant 0 : i32
    %c0_i32_1 = arith.constant 0 : i32
    return %c0_i32, %c0_i32_0 : i32, i32
  }
  func.func @transform_2(%arg0: i32, %arg1: memref<9xi32, #tpu.memory_space<smem>>, %arg2: memref<16xi32, #tpu.memory_space<smem>>) -> (i32, i32) {
    %c0_i32 = arith.constant 0 : i32
    %c0_i32_0 = arith.constant 0 : i32
    %c0_i32_1 = arith.constant 0 : i32
    return %c0_i32, %c0_i32_0 : i32, i32
  }
  func.func @transform_3(%arg0: i32, %arg1: memref<9xi32, #tpu.memory_space<smem>>, %arg2: memref<16xi32, #tpu.memory_space<smem>>) -> (i32, i32) {
    %c0_i32 = arith.constant 0 : i32
    %c0_i32_0 = arith.constant 0 : i32
    %c0_i32_1 = arith.constant 0 : i32
    return %c0_i32, %c0_i32_0 : i32, i32
  }
  func.func @transform_4(%arg0: i32, %arg1: memref<9xi32, #tpu.memory_space<smem>>, %arg2: memref<16xi32, #tpu.memory_space<smem>>) -> (i32, i32) {
    %c0_i32 = arith.constant 0 : i32
    %c0_i32_0 = arith.constant 0 : i32
    %c0_i32_1 = arith.constant 0 : i32
    return %c0_i32, %c0_i32_0 : i32, i32
  }
  func.func @transform_5(%arg0: i32, %arg1: memref<9xi32, #tpu.memory_space<smem>>, %arg2: memref<16xi32, #tpu.memory_space<smem>>) -> (i32, i32) {
    %c0_i32 = arith.constant 0 : i32
    %c0_i32_0 = arith.constant 0 : i32
    %c0_i32_1 = arith.constant 0 : i32
    return %c0_i32, %c0_i32_0 : i32, i32
  }
  func.func @transform_6(%arg0: i32, %arg1: memref<9xi32, #tpu.memory_space<smem>>, %arg2: memref<16xi32, #tpu.memory_space<smem>>) -> (i32, i32) {
    %c0_i32 = arith.constant 0 : i32
    %c0_i32_0 = arith.constant 0 : i32
    %c0_i32_1 = arith.constant 0 : i32
    return %c0_i32, %c0_i32_0 : i32, i32
  }
  func.func @transform_7(%arg0: i32, %arg1: memref<9xi32, #tpu.memory_space<smem>>, %arg2: memref<16xi32, #tpu.memory_space<smem>>) -> (i32, i32) {
    %c0_i32 = arith.constant 0 : i32
    %c0_i32_0 = arith.constant 0 : i32
    %c0_i32_1 = arith.constant 0 : i32
    return %c0_i32, %c0_i32_0 : i32, i32
  }
  func.func @transform_8(%arg0: i32, %arg1: memref<9xi32, #tpu.memory_space<smem>>, %arg2: memref<16xi32, #tpu.memory_space<smem>>) -> (i32, i32) {
    %c0_i32 = arith.constant 0 : i32
    %c0_i32_0 = arith.constant 0 : i32
    %c0_i32_1 = arith.constant 0 : i32
    return %c0_i32, %c0_i32_0 : i32, i32
  }
  func.func @transform_9(%arg0: i32, %arg1: memref<9xi32, #tpu.memory_space<smem>>, %arg2: memref<16xi32, #tpu.memory_space<smem>>) -> (i32, i32) {
    %c0_i32 = arith.constant 0 : i32
    %c0_i32_0 = arith.constant 0 : i32
    %c0_i32_1 = arith.constant 0 : i32
    return %c0_i32, %c0_i32_0 : i32, i32
  }
  func.func @transform_10(%arg0: i32, %arg1: memref<9xi32, #tpu.memory_space<smem>>, %arg2: memref<16xi32, #tpu.memory_space<smem>>) -> (i32, i32) {
    %c0_i32 = arith.constant 0 : i32
    %c0_i32_0 = arith.constant 0 : i32
    %c0_i32_1 = arith.constant 0 : i32
    return %c0_i32, %c0_i32_0 : i32, i32
  }
  func.func @transform_11(%arg0: i32, %arg1: memref<9xi32, #tpu.memory_space<smem>>, %arg2: memref<16xi32, #tpu.memory_space<smem>>) -> (i32, i32) {
    %c0_i32 = arith.constant 0 : i32
    %c0_i32_0 = arith.constant 0 : i32
    %c0_i32_1 = arith.constant 0 : i32
    return %c0_i32, %c0_i32_0 : i32, i32
  }
  func.func @transform_12(%arg0: i32, %arg1: memref<9xi32, #tpu.memory_space<smem>>, %arg2: memref<16xi32, #tpu.memory_space<smem>>) -> (i32, i32) {
    %c0_i32 = arith.constant 0 : i32
    %c0_i32_0 = arith.constant 0 : i32
    %c0_i32_1 = arith.constant 0 : i32
    return %c0_i32, %c0_i32_0 : i32, i32
  }
  func.func @transform_13(%arg0: i32, %arg1: memref<9xi32, #tpu.memory_space<smem>>, %arg2: memref<16xi32, #tpu.memory_space<smem>>) -> (i32, i32) {
    %c0_i32 = arith.constant 0 : i32
    %c0_i32_0 = arith.constant 0 : i32
    %c0_i32_1 = arith.constant 0 : i32
    return %c0_i32, %c0_i32_0 : i32, i32
  }
}

</mosaic_0001>

<llo_original>
// kernel: tpu_custom_call.1
$region0: #{tpu_custom_call.1}
  #allocation0 [shape = 'u32[]', space=smem, size = 0x4, offset = 0x4, fixed_abs, tag = 'smem constant byte address 0x4 - core index']
  #allocation1 [shape = 'u32[144,128]{1,0:T(1,128)}', space=vmem, size = 0x12000, scoped, tag = 'internal scratch']
  #allocation2 [shape = 'f32[8,128]{1,0:T(8,128)}', space=vmem, size = 0x1000, scoped, tag = 'scratch operand']
  #allocation3 [shape = 'f32[8,128]{1,0:T(8,128)}', space=vmem, size = 0x1000, scoped, tag = 'scratch operand']
  #allocation4 [shape = 'f32[8,128]{1,0:T(8,128)}', space=vmem, size = 0x1000, scoped, tag = 'scratch operand']
  #allocation5 [shape = 'f32[8,128]{1,0:T(8,128)}', space=vmem, size = 0x1000, scoped, tag = 'scratch operand']
  #allocation6 [shape = 'f32[8,128]{1,0:T(8,128)}', space=vmem, size = 0x1000, scoped, tag = 'scratch operand']
  #allocation7 [shape = 'f32[8,128]{1,0:T(8,128)}', space=vmem, size = 0x1000, scoped, tag = 'scratch operand']
  #allocation8 [shape = 'f32[8,128]{1,0:T(8,128)}', space=vmem, size = 0x1000, scoped, tag = 'scratch operand']
  #allocation9 [shape = 's32[1]{0}', space=sflag, size = 0x4, scoped, tag = 'scoped memory for tpu_custom_call.1']
  #allocation10 [shape = 'u8[512]{0}', space=smem, size = 0x200, scoped, tag = 'prefetched SMEM operand 0']
  #allocation11 [shape = 'u8[512]{0}', space=smem, size = 0x200, scoped, tag = 'prefetched SMEM operand 1']
  %s0 = inlined_call_operand.hbm [shape: s32[9], index: 0, kind: input, shape index: {}]
  %s1 = inlined_call_operand.vmem [shape: s32[16], index: 1, kind: input, shape index: {}]
  %s2 = inlined_call_operand.hbm [shape: f32[8,128], index: 2, kind: input, shape index: {}]
  %s3 = inlined_call_operand.hbm [shape: bf16[128,384], index: 3, kind: input, shape index: {}]
  %s4 = inlined_call_operand.hbm [shape: bf16[128,128], index: 4, kind: input, shape index: {}]
  %s5 = inlined_call_operand.hbm [shape: bf16[128,128], index: 5, kind: input, shape index: {}]
  %s6 = inlined_call_operand.vmem [shape: f32[1,128], index: 6, kind: input, shape index: {}]
  %s7 = inlined_call_operand.vmem [shape: f32[1,128], index: 7, kind: input, shape index: {}]
  %s8 = inlined_call_operand.vmem [shape: f32[1,128], index: 8, kind: input, shape index: {}]
  %s9 = inlined_call_operand.hbm [shape: bf16[128,128], index: 9, kind: input, shape index: {}]
  %s10 = inlined_call_operand.vmem [shape: f32[1,128], index: 10, kind: input, shape index: {}]
  %s11 = inlined_call_operand.hbm [shape: bf16[128,128], index: 11, kind: input, shape index: {}]
  %s12 = inlined_call_operand.vmem [shape: f32[1,128], index: 12, kind: input, shape index: {}]
  %s13 = inlined_call_operand.vmem [shape: f32[1,128], index: 13, kind: input, shape index: {}]
  %s14 = inlined_call_operand.vmem [shape: f32[1,128], index: 14, kind: input, shape index: {}]
  %s15 = inlined_call_operand.hbm [shape: f32[8,128], index: 15, kind: output, shape index: {}]
  %s16 = sld [smem:[#allocation0]]
  $region108: #{tpu_custom_call.1} parent=0
    _
  %s18 = ssub.s32 1, %s16
  %s19 = scalar_select 0, %s18, %s16
  %21 = dma.hbm_to_smem %s0, 16, [#allocation10], [#allocation9]
  %s22 = sshll.u32 %s1, 4
  %s23 = int_to_ptr.vmem [resolvable:$true] %s22
  %25 = dma.vmem_to_smem %s23, 16, [#allocation11], [#allocation9]
  %26 = dma.done [#allocation9], 32
  %27 = sfence
  $region1: #{tpu_custom_call.1} parent=0
    #allocation12 [shape = 'u8[4096]{0}', space=vmem, size = 0x1000, scoped, tag = 'input window, operand 2, single buffered']
    #allocation13 [shape = 's32[1]{0}', space=sflag, size = 0x4, scoped, tag = 'scoped memory for tpu_custom_call.1']
    #allocation14 [shape = 's32[1]{0}', space=sflag, size = 0x4, scoped, tag = 'scoped memory for tpu_custom_call.1']
    #allocation15 [shape = 'u8[98304]{0}', space=vmem, size = 0x18000, scoped, tag = 'input window, operand 3, single buffered']
    #allocation16 [shape = 's32[1]{0}', space=sflag, size = 0x4, scoped, tag = 'scoped memory for tpu_custom_call.1']
    #allocation17 [shape = 'u8[32768]{0}', space=vmem, size = 0x8000, scoped, tag = 'input window, operand 4, single buffered']
    #allocation18 [shape = 'u8[32768]{0}', space=vmem, size = 0x8000, scoped, tag = 'input window, operand 5, single buffered']
    #allocation19 [shape = 's32[1]{0}', space=sflag, size = 0x4, scoped, tag = 'scoped memory for tpu_custom_call.1']
    #allocation20 [shape = 'u8[32768]{0}', space=vmem, size = 0x8000, scoped, tag = 'input window, operand 9, single buffered']
    #allocation21 [shape = 'u8[32768]{0}', space=vmem, size = 0x8000, scoped, tag = 'input window, operand 11, single buffered']
    #allocation22 [shape = 's32[1]{0}', space=sflag, size = 0x4, scoped, tag = 'scoped memory for tpu_custom_call.1']
    #allocation23 [shape = 'u8[4096]{0}', space=vmem, size = 0x1000, scoped, tag = 'output window, operand 0, single buffered']
    %28 = vsyncpa [#allocation13], 0
    %29 = vsyncpa [#allocation16], 0
    %30 = vsyncpa [#allocation19], 0
    %31 = vsyncpa [#allocation22], 0
    %32 = vsyncpa [#allocation14], 0
    // Predicated region
    $region2: #{tpu_custom_call.1} parent=1 // pred_check
      _
    $region3: #{tpu_custom_call.1} parent=1 // pred_check_branch
      %34 = sbr.rel (0) target = $region5
    $region4: #{tpu_custom_call.1} parent=1 // pred_region
      %s36 = ssub.s32 128, 128
      %37 = vsyncadd [#allocation13], %s36
      %s39 = sshll.u32 [#allocation12], 4
      %s40 = int_to_ptr.vmem [resolvable:$true] %s39
      %42 = dma.hbm_to_vmem [thread:$0]  %s2, 128, %s40, [#allocation13]
    $region5: #{tpu_custom_call.1} parent=1 // pred_fallthru
      _
    // Predicated region
    $region6: #{tpu_custom_call.1} parent=1 // pred_check
      _
    $region7: #{tpu_custom_call.1} parent=1 // pred_check_branch
      %44 = sbr.rel (0) target = $region9
    $region8: #{tpu_custom_call.1} parent=1 // pred_region
      %s46 = ssub.s32 3072, 3072
      %47 = vsyncadd [#allocation16], %s46
      %s48 = sshll.u32 [#allocation15], 4
      %s49 = int_to_ptr.vmem [resolvable:$true] %s48
      %54 = dma.hbm_to_vmem [thread:$0]  %s3, 3072, %s49, [#allocation16], 192, 192, 12
    $region9: #{tpu_custom_call.1} parent=1 // pred_fallthru
      _
    // Predicated region
    $region10: #{tpu_custom_call.1} parent=1 // pred_check
      _
    $region11: #{tpu_custom_call.1} parent=1 // pred_check_branch
      %56 = sbr.rel (0) target = $region13
    $region12: #{tpu_custom_call.1} parent=1 // pred_region
      %s58 = ssub.s32 1024, 1024
      %59 = vsyncadd [#allocation16], %s58
      %s60 = sshll.u32 [#allocation17], 4
      %s61 = int_to_ptr.vmem [resolvable:$true] %s60
      %66 = dma.hbm_to_vmem [thread:$0]  %s4, 1024, %s61, [#allocation16], 64, 64, 4
    $region13: #{tpu_custom_call.1} parent=1 // pred_fallthru
      _
    // Predicated region
    $region14: #{tpu_custom_call.1} parent=1 // pred_check
      _
    $region15: #{tpu_custom_call.1} parent=1 // pred_check_branch
      %68 = sbr.rel (0) target = $region17
    $region16: #{tpu_custom_call.1} parent=1 // pred_region
      %s70 = ssub.s32 1024, 1024
      %71 = vsyncadd [#allocation19], %s70
      %s72 = sshll.u32 [#allocation18], 4
      %s73 = int_to_ptr.vmem [resolvable:$true] %s72
      %78 = dma.hbm_to_vmem [thread:$0]  %s5, 1024, %s73, [#allocation19], 64, 64, 4
    $region17: #{tpu_custom_call.1} parent=1 // pred_fallthru
      _
    // Predicated region
    $region18: #{tpu_custom_call.1} parent=1 // pred_check
      _
    $region19: #{tpu_custom_call.1} parent=1 // pred_check_branch
      %80 = sbr.rel (0) target = $region21
    $region20: #{tpu_custom_call.1} parent=1 // pred_region
      _
    $region21: #{tpu_custom_call.1} parent=1 // pred_fallthru
      _
    // Predicated region
    $region22: #{tpu_custom_call.1} parent=1 // pred_check
      _
    $region23: #{tpu_custom_call.1} parent=1 // pred_check_branch
      %82 = sbr.rel (0) target = $region25
    $region24: #{tpu_custom_call.1} parent=1 // pred_region
      _
    $region25: #{tpu_custom_call.1} parent=1 // pred_fallthru
      _
    // Predicated region
    $region26: #{tpu_custom_call.1} parent=1 // pred_check
      _
    $region27: #{tpu_custom_call.1} parent=1 // pred_check_branch
      %84 = sbr.rel (0) target = $region29
    $region28: #{tpu_custom_call.1} parent=1 // pred_region
      _
    $region29: #{tpu_custom_call.1} parent=1 // pred_fallthru
      _
    // Predicated region
    $region30: #{tpu_custom_call.1} parent=1 // pred_check
      _
    $region31: #{tpu_custom_call.1} parent=1 // pred_check_branch
      %86 = sbr.rel (0) target = $region33
    $region32: #{tpu_custom_call.1} parent=1 // pred_region
      %s88 = ssub.s32 1024, 1024
      %89 = vsyncadd [#allocation19], %s88
      %s90 = sshll.u32 [#allocation20], 4
      %s91 = int_to_ptr.vmem [resolvable:$true] %s90
      %96 = dma.hbm_to_vmem [thread:$0]  %s9, 1024, %s91, [#allocation19], 64, 64, 4
    $region33: #{tpu_custom_call.1} parent=1 // pred_fallthru
      _
    // Predicated region
    $region34: #{tpu_custom_call.1} parent=1 // pred_check
      _
    $region35: #{tpu_custom_call.1} parent=1 // pred_check_branch
      %98 = sbr.rel (0) target = $region37
    $region36: #{tpu_custom_call.1} parent=1 // pred_region
      _
    $region37: #{tpu_custom_call.1} parent=1 // pred_fallthru
      _
    // Predicated region
    $region38: #{tpu_custom_call.1} parent=1 // pred_check
      _
    $region39: #{tpu_custom_call.1} parent=1 // pred_check_branch
      %100 = sbr.rel (0) target = $region41
    $region40: #{tpu_custom_call.1} parent=1 // pred_region
      %s102 = ssub.s32 1024, 1024
      %103 = vsyncadd [#allocation22], %s102
      %s104 = sshll.u32 [#allocation21], 4
      %s105 = int_to_ptr.vmem [resolvable:$true] %s104
      %110 = dma.hbm_to_vmem [thread:$0]  %s11, 1024, %s105, [#allocation22], 64, 64, 4
    $region41: #{tpu_custom_call.1} parent=1 // pred_fallthru
      _
    // Predicated region
    $region42: #{tpu_custom_call.1} parent=1 // pred_check
      _
    $region43: #{tpu_custom_call.1} parent=1 // pred_check_branch
      %112 = sbr.rel (0) target = $region45
    $region44: #{tpu_custom_call.1} parent=1 // pred_region
      _
    $region45: #{tpu_custom_call.1} parent=1 // pred_fallthru
      _
    // Predicated region
    $region46: #{tpu_custom_call.1} parent=1 // pred_check
      _
    $region47: #{tpu_custom_call.1} parent=1 // pred_check_branch
      %114 = sbr.rel (0) target = $region49
    $region48: #{tpu_custom_call.1} parent=1 // pred_region
      _
    $region49: #{tpu_custom_call.1} parent=1 // pred_fallthru
      _
    // Predicated region
    $region50: #{tpu_custom_call.1} parent=1 // pred_check
      _
    $region51: #{tpu_custom_call.1} parent=1 // pred_check_branch
      %116 = sbr.rel (0) target = $region53
    $region52: #{tpu_custom_call.1} parent=1 // pred_region
      _
    $region53: #{tpu_custom_call.1} parent=1 // pred_fallthru
      _
    // Predicated region
    $region54: #{tpu_custom_call.1} parent=1 // pred_check
      _
    $region55: #{tpu_custom_call.1} parent=1 // pred_check_branch
      %118 = sbr.rel (0) target = $region57
    $region56: #{tpu_custom_call.1} parent=1 // pred_region
      %119 = dma.done [#allocation13], 128
    $region57: #{tpu_custom_call.1} parent=1 // pred_fallthru
      _
    // Predicated region
    $region58: #{tpu_custom_call.1} parent=1 // pred_check
      _
    $region59: #{tpu_custom_call.1} parent=1 // pred_check_branch
      %121 = sbr.rel (0) target = $region61
    $region60: #{tpu_custom_call.1} parent=1 // pred_region
      %122 = dma.done [#allocation16], 3072
    $region61: #{tpu_custom_call.1} parent=1 // pred_fallthru
      _
    // Predicated region
    $region62: #{tpu_custom_call.1} parent=1 // pred_check
      _
    $region63: #{tpu_custom_call.1} parent=1 // pred_check_branch
      %124 = sbr.rel (0) target = $region65
    $region64: #{tpu_custom_call.1} parent=1 // pred_region
      %125 = dma.done [#allocation16], 1024
    $region65: #{tpu_custom_call.1} parent=1 // pred_fallthru
      _
    // Predicated region
    $region66: #{tpu_custom_call.1} parent=1 // pred_check
      _
    $region67: #{tpu_custom_call.1} parent=1 // pred_check_branch
      %127 = sbr.rel (0) target = $region69
    $region68: #{tpu_custom_call.1} parent=1 // pred_region
      %128 = dma.done [#allocation19], 1024
    $region69: #{tpu_custom_call.1} parent=1 // pred_fallthru
      _
    // Predicated region
    $region70: #{tpu_custom_call.1} parent=1 // pred_check
      _
    $region71: #{tpu_custom_call.1} parent=1 // pred_check_branch
      %130 = sbr.rel (0) target = $region73
    $region72: #{tpu_custom_call.1} parent=1 // pred_region
      %131 = dma.done [#allocation19], 1024
    $region73: #{tpu_custom_call.1} parent=1 // pred_fallthru
      _
    // Predicated region
    $region74: #{tpu_custom_call.1} parent=1 // pred_check
      _
    $region75: #{tpu_custom_call.1} parent=1 // pred_check_branch
      %133 = sbr.rel (0) target = $region77
    $region76: #{tpu_custom_call.1} parent=1 // pred_region
      %134 = dma.done [#allocation22], 1024
    $region77: #{tpu_custom_call.1} parent=1 // pred_fallthru
      _
    %p136 = scmp.eq.s32.totalorder 0, 0
    // Predicated region
    $region78: #{tpu_custom_call.1} parent=1 // pred_check
      %p137 = pneg %p136
    $region79: #{tpu_custom_call.1} parent=1 // pred_check_branch
      %139 = sbr.rel (%p137) target = $region81
    $region80: #{tpu_custom_call.1} parent=1 // pred_region
      %v140 = vld [vmem:[#allocation12] sm:$0xff]
      %v141 = vpack.c.bf16 %v140, %v140
      %v142 = vld [vmem:[#allocation15] sm:$0xff]
      %v143 = vld [vmem:[#allocation15 + $0x8] sm:$0xf]
      %v144 = vld [vmem:[#allocation15 + $0xc] sm:$0xff]
      %v145 = vld [vmem:[#allocation15 + $0x14] sm:$0xf]
      %v146 = vld [vmem:[#allocation15 + $0x18] sm:$0xff]
      %v147 = vld [vmem:[#allocation15 + $0x20] sm:$0xf]
      %v148 = vld [vmem:[#allocation15 + $0x24] sm:$0xff]
      %v149 = vld [vmem:[#allocation15 + $0x2c] sm:$0xf]
      %v150 = vld [vmem:[#allocation15 + $0x30] sm:$0xff]
      %v151 = vld [vmem:[#allocation15 + $0x38] sm:$0xf]
      %v152 = vld [vmem:[#allocation15 + $0x3c] sm:$0xff]
      %v153 = vld [vmem:[#allocation15 + $0x44] sm:$0xf]
      %v154 = vld [vmem:[#allocation15 + $0x48] sm:$0xff]
      %v155 = vld [vmem:[#allocation15 + $0x50] sm:$0xf]
      %v156 = vld [vmem:[#allocation15 + $0x54] sm:$0xff]
      %v157 = vld [vmem:[#allocation15 + $0x5c] sm:$0xf]
      %v158 = vld [vmem:[#allocation15 + $0x60] sm:$0xff]
      %v159 = vld [vmem:[#allocation15 + $0x68] sm:$0xf]
      %v160 = vld [vmem:[#allocation15 + $0x6c] sm:$0xff]
      %v161 = vld [vmem:[#allocation15 + $0x74] sm:$0xf]
      %v162 = vld [vmem:[#allocation15 + $0x78] sm:$0xff]
      %v163 = vld [vmem:[#allocation15 + $0x80] sm:$0xf]
      %v164 = vld [vmem:[#allocation15 + $0x84] sm:$0xff]
      %v165 = vld [vmem:[#allocation15 + $0x8c] sm:$0xf]
      %v166 = vld [vmem:[#allocation15 + $0x90] sm:$0xff]
      %v167 = vld [vmem:[#allocation15 + $0x98] sm:$0xf]
      %v168 = vld [vmem:[#allocation15 + $0x9c] sm:$0xff]
      %v169 = vld [vmem:[#allocation15 + $0xa4] sm:$0xf]
      %v170 = vld [vmem:[#allocation15 + $0xa8] sm:$0xff]
      %v171 = vld [vmem:[#allocation15 + $0xb0] sm:$0xf]
      %v172 = vld [vmem:[#allocation15 + $0xb4] sm:$0xff]
      %v173 = vld [vmem:[#allocation15 + $0xbc] sm:$0xf]
      %v206 = vunpack.c.l.b16 %v142
      %v207 = vunpack.c.h.b16 %v142
      %v208 = vunpack.c.l.b16 %v143
      %v209 = vunpack.c.l.b16 %v144
      %v210 = vunpack.c.h.b16 %v144
      %v211 = vunpack.c.l.b16 %v145
      %v212 = vunpack.c.l.b16 %v146
      %v213 = vunpack.c.h.b16 %v146
      %v214 = vunpack.c.l.b16 %v147
      %v215 = vunpack.c.l.b16 %v148
      %v216 = vunpack.c.h.b16 %v148
      %v217 = vunpack.c.l.b16 %v149
      %v218 = vunpack.c.l.b16 %v150
      %v219 = vunpack.c.h.b16 %v150
      %v220 = vunpack.c.l.b16 %v151
      %v221 = vunpack.c.l.b16 %v152
      %v222 = vunpack.c.h.b16 %v152
      %v223 = vunpack.c.l.b16 %v153
      %v224 = vunpack.c.l.b16 %v154
      %v225 = vunpack.c.h.b16 %v154
      %v226 = vunpack.c.l.b16 %v155
      %v227 = vunpack.c.l.b16 %v156
      %v228 = vunpack.c.h.b16 %v156
      %v229 = vunpack.c.l.b16 %v157
      %v230 = vunpack.c.l.b16 %v158
      %v231 = vunpack.c.h.b16 %v158
      %v232 = vunpack.c.l.b16 %v159
      %v233 = vunpack.c.l.b16 %v160
      %v234 = vunpack.c.h.b16 %v160
      %v235 = vunpack.c.l.b16 %v161
      %v236 = vunpack.c.l.b16 %v162
      %v237 = vunpack.c.h.b16 %v162
      %v238 = vunpack.c.l.b16 %v163
      %v239 = vunpack.c.l.b16 %v164
      %v240 = vunpack.c.h.b16 %v164
      %v241 = vunpack.c.l.b16 %v165
      %v242 = vunpack.c.l.b16 %v166
      %v243 = vunpack.c.h.b16 %v166
      %v244 = vunpack.c.l.b16 %v167
      %v245 = vunpack.c.l.b16 %v168
      %v246 = vunpack.c.h.b16 %v168
      %v247 = vunpack.c.l.b16 %v169
      %v248 = vunpack.c.l.b16 %v170
      %v249 = vunpack.c.h.b16 %v170
      %v250 = vunpack.c.l.b16 %v171
      %v251 = vunpack.c.l.b16 %v172
      %v252 = vunpack.c.h.b16 %v172
      %v253 = vunpack.c.l.b16 %v173
      %v254 = vpack.c.b16 %v209, %v206
      %v255 = vpack.c.b16 %v210, %v207
      %v256 = vpack.c.b16 %v211, %v208
      %v257 = vpack.c.b16 %v215, %v212
      %v258 = vpack.c.b16 %v216, %v213
      %v259 = vpack.c.b16 %v217, %v214
      %v260 = vpack.c.b16 %v221, %v218
      %v261 = vpack.c.b16 %v222, %v219
      %v262 = vpack.c.b16 %v223, %v220
      %v263 = vpack.c.b16 %v227, %v224
      %v264 = vpack.c.b16 %v228, %v225
      %v265 = vpack.c.b16 %v229, %v226
      %v266 = vpack.c.b16 %v233, %v230
      %v267 = vpack.c.b16 %v234, %v231
      %v268 = vpack.c.b16 %v235, %v232
      %v269 = vpack.c.b16 %v239, %v236
      %v270 = vpack.c.b16 %v240, %v237
      %v271 = vpack.c.b16 %v241, %v238
      %v272 = vpack.c.b16 %v245, %v242
      %v273 = vpack.c.b16 %v246, %v243
      %v274 = vpack.c.b16 %v247, %v244
      %v275 = vpack.c.b16 %v251, %v248
      %v276 = vpack.c.b16 %v252, %v249
      %v277 = vpack.c.b16 %v253, %v250
      %302 = vmatprep.subr.bf16.mxu0 %v255
      %303 = vmatpush1.bf16.msra.mxu0 %v254
      %304 = vmatprep.subr.bf16.mxu0 %v258
      %305 = vmatpush1.bf16.msra.mxu0 %v257
      %306 = vmatprep.subr.bf16.mxu0 %v261
      %307 = vmatpush1.bf16.msra.mxu0 %v260
      %308 = vmatprep.subr.bf16.mxu0 %v264
      %309 = vmatpush1.bf16.msra.mxu0 %v263
      %310 = vmatprep.subr.bf16.mxu0 %v267
      %311 = vmatpush1.bf16.msra.mxu0 %v266
      %312 = vmatprep.subr.bf16.mxu0 %v270
      %313 = vmatpush1.bf16.msra.mxu0 %v269
      %314 = vmatprep.subr.bf16.mxu0 %v273
      %315 = vmatpush1.bf16.msra.mxu0 %v272
      %316 = vmatprep.subr.bf16.mxu0 %v276
      %317 = vmatpush1.bf16.msra.mxu0 %v275
      %318 = vmatprep.subr.bf16.mxu0 0
      %319 = vmatpush1.bf16.msra.mxu0 0
      %320 = vmatprep.subr.bf16.mxu0 0
      %321 = vmatpush1.bf16.msra.mxu0 0
      %322 = vmatprep.subr.bf16.mxu0 0
      %323 = vmatpush1.bf16.msra.mxu0 0
      %324 = vmatprep.subr.bf16.mxu0 0
      %325 = vmatpush1.bf16.msra.mxu0 0
      %326 = vmatprep.subr.bf16.mxu0 0
      %327 = vmatpush1.bf16.msra.mxu0 0
      %328 = vmatprep.subr.bf16.mxu0 0
      %329 = vmatpush1.bf16.msra.mxu0 0
      %330 = vmatprep.subr.bf16.mxu0 0
      %331 = vmatpush1.bf16.msra.mxu0 0
      %332 = vmatprep.subr.bf16.mxu0 0
      %333 = vmatpush1.bf16.msra.mxu0 0
      %334 = vmatprep.mubr.bf16.mxu0 0
      %335 = vmatmul.mubr.bf16.gmra.mrb[0].mxu0 %v141
      %v336 = vpop.f32.mrb[0].mxu0
      %v337 = vadd.f32 0.0, %v336
      %v338 = vpop.f32.mrb[0].mxu0
      %v339 = vadd.f32 0.0, %v338
      %v340 = vpop.f32.mrb[0].mxu0
      %v341 = vpop.f32.mrb[0].mxu0
      %342 = vdwg.mxu0
      %343 = vmatprep.subr.bf16.mxu0 0
      %344 = vmatpush1.bf16.msra.mxu0 %v256
      %345 = vmatprep.subr.bf16.mxu0 0
      %346 = vmatpush1.bf16.msra.mxu0 %v259
      %347 = vmatprep.subr.bf16.mxu0 0
      %348 = vmatpush1.bf16.msra.mxu0 %v262
      %349 = vmatprep.subr.bf16.mxu0 0
      %350 = vmatpush1.bf16.msra.mxu0 %v265
      %351 = vmatprep.subr.bf16.mxu0 0
      %352 = vmatpush1.bf16.msra.mxu0 %v268
      %353 = vmatprep.subr.bf16.mxu0 0
      %354 = vmatpush1.bf16.msra.mxu0 %v271
      %355 = vmatprep.subr.bf16.mxu0 0
      %356 = vmatpush1.bf16.msra.mxu0 %v274
      %357 = vmatprep.subr.bf16.mxu0 0
      %358 = vmatpush1.bf16.msra.mxu0 %v277
      %359 = vmatprep.subr.bf16.mxu0 0
      %360 = vmatpush1.bf16.msra.mxu0 0
      %361 = vmatprep.subr.bf16.mxu0 0
      %362 = vmatpush1.bf16.msra.mxu0 0
      %363 = vmatprep.subr.bf16.mxu0 0
      %364 = vmatpush1.bf16.msra.mxu0 0
      %365 = vmatprep.subr.bf16.mxu0 0
      %366 = vmatpush1.bf16.msra.mxu0 0
      %367 = vmatprep.subr.bf16.mxu0 0
      %368 = vmatpush1.bf16.msra.mxu0 0
      %369 = vmatprep.subr.bf16.mxu0 0
      %370 = vmatpush1.bf16.msra.mxu0 0
      %371 = vmatprep.subr.bf16.mxu0 0
      %372 = vmatpush1.bf16.msra.mxu0 0
      %373 = vmatprep.subr.bf16.mxu0 0
      %374 = vmatpush1.bf16.msra.mxu0 0
      %375 = vmatprep.mubr.bf16.mxu0 0
      %376 = vmatmul.mubr.bf16.gmra.mrb[0].mxu0 %v141
      %v377 = vpop.f32.mrb[0].mxu0
      %v378 = vadd.f32 0.0, %v377
      %v379 = vpop.f32.mrb[0].mxu0
      %v380 = vpop.f32.mrb[0].mxu0
      %v381 = vpop.f32.mrb[0].mxu0
      %382 = vdwg.mxu0
      %v383 = vmul.f32 %v337, 0.35355338
      %384 = vst [vmem:[#allocation2] sm:$0xff] %v383
      %385 = vst [vmem:[#allocation3] sm:$0xff] %v339
      %386 = vst [vmem:[#allocation4] sm:$0xff] %v378
      %387 = vst [vmem:[#allocation5] sm:$0xff] 0.0
      %388 = vst [vmem:[#allocation6] sm:$0xff] 0.0
    $region81: #{tpu_custom_call.1} parent=1 // pred_fallthru
      _
    %v389 = vlaneseq
    %v390 = vshrl.u32 %v389, 7
    loop: start=0, step=1, limit=8
    $region82: #{tpu_custom_call.1} parent=1 // loop_pre_header
      _
    $region83: #{tpu_custom_call.1} parent=1 // loop_header
      %s392 = sphi 0, %s396
      %p393 = scmp.ge.s32.totalorder %s392, 8
    $region84: #{tpu_custom_call.1} parent=1 // loop_header_branch
      %395 = sbr.rel (%p393) target = $region88
    $region85: #{tpu_custom_call.1} parent=1 // loop_body
      %s397 = smul.u32 0, 8
      %s398 = sadd.s32 %s397, %s392
      %s399 = sld [smem:[#allocation10 + %s398]]
      %s400 = sadd.s32 %s398, 1
      %s401 = sld [smem:[#allocation10 + %s400]]
      %s402 = scalar_lea.vmem [#allocation2], %s398
      %v403 = vld [vmem:[%s402] sm:$0x1]
      %404 = vst [vmem:[#allocation7] sm:$0xff] 0.0
      %405 = vst [vmem:[#allocation8] sm:$0xff] 0.0
      %s406 = ssub.s32 %s401, %s399
      %s407 = sadd.s32 %s406, 7
      %p408 = scmp.lt.s32.totalorder %s407, 0
      %s409 = ssub.s32 0, %s407
      %s410 = scalar_select %p408, %s409, %s407
      %s411 = sshrl.u32 %s410, 3
      %s412 = ssub.s32 0, %s411
      %s413 = scalar_select %p408, %s412, %s411
      // While loop
      $region89: #{tpu_custom_call.1} parent=85 // loop_pre_header
        _
      $region90: #{tpu_custom_call.1} parent=85 // loop_header
        %s415 = sphi 0, %s417
        %p416 = scmp.ge.s32.totalorder %s415, %s413
      $region91: #{tpu_custom_call.1} parent=85 // loop_header_branch
        %419 = sbr.rel (%p416) target = $region95
      $region92: #{tpu_custom_call.1} parent=85 // loop_body
        %s420 = smul.u32 %s415, 8
        %s421 = sadd.s32 %s399, %s420
        %p422 = scmp.lt.s32.totalorder %s421, %s401
        %s423 = scalar_select %p422, %s421, %s399
        %s424 = sld [smem:[#allocation11 + %s423]]
        %s425 = scalar_lea.vmem [#allocation3], %s424
        %v426 = vld [vmem:[%s425] sm:$0x1]
        %s427 = scalar_lea.vmem [#allocation4], %s424
        %v428 = vld [vmem:[%s427] sm:$0x1]
        %s429 = sadd.s32 %s421, 1
        %p430 = scmp.lt.s32.totalorder %s429, %s401
        %s431 = scalar_select %p430, %s429, %s399
        %s432 = sld [smem:[#allocation11 + %s431]]
        %s433 = scalar_lea.vmem [#allocation3], %s432
        %v434 = vld [vmem:[%s433] sm:$0x1]
        %s435 = scalar_lea.vmem [#allocation4], %s432
        %v436 = vld [vmem:[%s435] sm:$0x1]
        %s437 = sadd.s32 %s421, 2
        %p438 = scmp.lt.s32.totalorder %s437, %s401
        %s439 = scalar_select %p438, %s437, %s399
        %s440 = sld [smem:[#allocation11 + %s439]]
        %s441 = scalar_lea.vmem [#allocation3], %s440
        %v442 = vld [vmem:[%s441] sm:$0x1]
        %s443 = scalar_lea.vmem [#allocation4], %s440
        %v444 = vld [vmem:[%s443] sm:$0x1]
        %s445 = sadd.s32 %s421, 3
        %p446 = scmp.lt.s32.totalorder %s445, %s401
        %s447 = scalar_select %p446, %s445, %s399
        %s448 = sld [smem:[#allocation11 + %s447]]
        %s449 = scalar_lea.vmem [#allocation3], %s448
        %v450 = vld [vmem:[%s449] sm:$0x1]
        %s451 = scalar_lea.vmem [#allocation4], %s448
        %v452 = vld [vmem:[%s451] sm:$0x1]
        %s453 = sadd.s32 %s421, 4
        %p454 = scmp.lt.s32.totalorder %s453, %s401
        %s455 = scalar_select %p454, %s453, %s399
        %s456 = sld [smem:[#allocation11 + %s455]]
        %s457 = scalar_lea.vmem [#allocation3], %s456
        %v458 = vld [vmem:[%s457] sm:$0x1]
        %s459 = scalar_lea.vmem [#allocation4], %s456
        %v460 = vld [vmem:[%s459] sm:$0x1]
        %s461 = sadd.s32 %s421, 5
        %p462 = scmp.lt.s32.totalorder %s461, %s401
        %s463 = scalar_select %p462, %s461, %s399
        %s464 = sld [smem:[#allocation11 + %s463]]
        %s465 = scalar_lea.vmem [#allocation3], %s464
        %v466 = vld [vmem:[%s465] sm:$0x1]
        %s467 = scalar_lea.vmem [#allocation4], %s464
        %v468 = vld [vmem:[%s467] sm:$0x1]
        %s469 = sadd.s32 %s421, 6
        %p470 = scmp.lt.s32.totalorder %s469, %s401
        %s471 = scalar_select %p470, %s469, %s399
        %s472 = sld [smem:[#allocation11 + %s471]]
        %s473 = scalar_lea.vmem [#allocation3], %s472
        %v474 = vld [vmem:[%s473] sm:$0x1]
        %s475 = scalar_lea.vmem [#allocation4], %s472
        %v476 = vld [vmem:[%s475] sm:$0x1]
        %s477 = sadd.s32 %s421, 7
        %p478 = scmp.lt.s32.totalorder %s477, %s401
        %s479 = scalar_select %p478, %s477, %s399
        %s480 = sld [smem:[#allocation11 + %s479]]
        %s481 = scalar_lea.vmem [#allocation3], %s480
        %v482 = vld [vmem:[%s481] sm:$0x1]
        %s483 = scalar_lea.vmem [#allocation4], %s480
        %v484 = vld [vmem:[%s483] sm:$0x1]
        %v486 = vrot.slane %v434, 7
        %v489 = vrot.slane %v442, 6
        %v492 = vrot.slane %v450, 5
        %v495 = vrot.slane %v458, 4
        %v498 = vrot.slane %v466, 3
        %v501 = vrot.slane %v474, 2
        %v504 = vrot.slane %v482, 1
        %vm506 = vcmask 1040384
        %v507 = vsel %vm506, %v426, %v486
        %vm508 = vcmask 1041408
        %v509 = vsel %vm508, %v507, %v489
        %vm510 = vcmask 1042432
        %v511 = vsel %vm510, %v509, %v492
        %vm512 = vcmask 1043456
        %v513 = vsel %vm512, %v511, %v495
        %vm514 = vcmask 1044480
        %v515 = vsel %vm514, %v513, %v498
        %vm516 = vcmask 1045504
        %v517 = vsel %vm516, %v515, %v501
        %vm518 = vcmask 1046528
        %v519 = vsel %vm518, %v517, %v504
        %v521 = vrot.slane %v436, 7
        %v524 = vrot.slane %v444, 6
        %v527 = vrot.slane %v452, 5
        %v530 = vrot.slane %v460, 4
        %v533 = vrot.slane %v468, 3
        %v536 = vrot.slane %v476, 2
        %v539 = vrot.slane %v484, 1
        %v541 = vsel %vm506, %v428, %v521
        %v542 = vsel %vm508, %v541, %v524
        %v543 = vsel %vm510, %v542, %v527
        %v544 = vsel %vm512, %v543, %v530
        %v545 = vsel %vm514, %v544, %v533
        %v546 = vsel %vm516, %v545, %v536
        %v547 = vsel %vm518, %v546, %v539
        %v548 = vlaneseq
        %v549 = vshrl.u32 %v548, 7
        %v550 = vsub.s32 0, %v549
        %v551 = vrot.slane %v403, %v550
        %v552 = vmul.f32 %v551, %v519
        %v553 = vpack.c.bf16 %v552, %v552
        %v554 = vld [vmem:[#allocation17] sm:$0xf]
        %v555 = vld [vmem:[#allocation17 + $0x4] sm:$0xf]
        %v556 = vld [vmem:[#allocation17 + $0x8] sm:$0xf]
        %v557 = vld [vmem:[#allocation17 + $0xc] sm:$0xf]
        %v558 = vld [vmem:[#allocation17 + $0x10] sm:$0xf]
        %v559 = vld [vmem:[#allocation17 + $0x14] sm:$0xf]
        %v560 = vld [vmem:[#allocation17 + $0x18] sm:$0xf]
        %v561 = vld [vmem:[#allocation17 + $0x1c] sm:$0xf]
        %v562 = vld [vmem:[#allocation17 + $0x20] sm:$0xf]
        %v563 = vld [vmem:[#allocation17 + $0x24] sm:$0xf]
        %v564 = vld [vmem:[#allocation17 + $0x28] sm:$0xf]
        %v565 = vld [vmem:[#allocation17 + $0x2c] sm:$0xf]
        %v566 = vld [vmem:[#allocation17 + $0x30] sm:$0xf]
        %v567 = vld [vmem:[#allocation17 + $0x34] sm:$0xf]
        %v568 = vld [vmem:[#allocation17 + $0x38] sm:$0xf]
        %v569 = vld [vmem:[#allocation17 + $0x3c] sm:$0xf]
        %v586 = vunpack.c.l.b16 %v554
        %v587 = vunpack.c.l.b16 %v555
        %v588 = vunpack.c.l.b16 %v556
        %v589 = vunpack.c.l.b16 %v557
        %v590 = vunpack.c.l.b16 %v558
        %v591 = vunpack.c.l.b16 %v559
        %v592 = vunpack.c.l.b16 %v560
        %v593 = vunpack.c.l.b16 %v561
        %v594 = vunpack.c.l.b16 %v562
        %v595 = vunpack.c.l.b16 %v563
        %v596 = vunpack.c.l.b16 %v564
        %v597 = vunpack.c.l.b16 %v565
        %v598 = vunpack.c.l.b16 %v566
        %v599 = vunpack.c.l.b16 %v567
        %v600 = vunpack.c.l.b16 %v568
        %v601 = vunpack.c.l.b16 %v569
        %v602 = vpack.c.b16 %v587, %v586
        %v603 = vpack.c.b16 %v589, %v588
        %v604 = vpack.c.b16 %v591, %v590
        %v605 = vpack.c.b16 %v593, %v592
        %v606 = vpack.c.b16 %v595, %v594
        %v607 = vpack.c.b16 %v597, %v596
        %v608 = vpack.c.b16 %v599, %v598
        %v609 = vpack.c.b16 %v601, %v600
        %618 = vmatprep.subr.bf16.mxu0 0
        %619 = vmatpush1.bf16.msra.mxu0 %v602
        %620 = vmatprep.subr.bf16.mxu0 0
        %621 = vmatpush1.bf16.msra.mxu0 %v603
        %622 = vmatprep.subr.bf16.mxu0 0
        %623 = vmatpush1.bf16.msra.mxu0 %v604
        %624 = vmatprep.subr.bf16.mxu0 0
        %625 = vmatpush1.bf16.msra.mxu0 %v605
        %626 = vmatprep.subr.bf16.mxu0 0
        %627 = vmatpush1.bf16.msra.mxu0 %v606
        %628 = vmatprep.subr.bf16.mxu0 0
        %629 = vmatpush1.bf16.msra.mxu0 %v607
        %630 = vmatprep.subr.bf16.mxu0 0
        %631 = vmatpush1.bf16.msra.mxu0 %v608
        %632 = vmatprep.subr.bf16.mxu0 0
        %633 = vmatpush1.bf16.msra.mxu0 %v609
        %634 = vmatprep.subr.bf16.mxu0 0
        %635 = vmatpush1.bf16.msra.mxu0 0
        %636 = vmatprep.subr.bf16.mxu0 0
        %637 = vmatpush1.bf16.msra.mxu0 0
        %638 = vmatprep.subr.bf16.mxu0 0
        %639 = vmatpush1.bf16.msra.mxu0 0
        %640 = vmatprep.subr.bf16.mxu0 0
        %641 = vmatpush1.bf16.msra.mxu0 0
        %642 = vmatprep.subr.bf16.mxu0 0
        %643 = vmatpush1.bf16.msra.mxu0 0
        %644 = vmatprep.subr.bf16.mxu0 0
        %645 = vmatpush1.bf16.msra.mxu0 0
        %646 = vmatprep.subr.bf16.mxu0 0
        %647 = vmatpush1.bf16.msra.mxu0 0
        %648 = vmatprep.subr.bf16.mxu0 0
        %649 = vmatpush1.bf16.msra.mxu0 0
        %650 = vmatprep.mubr.bf16.mxu0 0
        %651 = vmatmul.mubr.bf16.gmra.mrb[0].mxu0 %v553
        %v652 = vpop.f32.mrb[0].mxu0
        %v653 = vadd.f32 0.0, %v652
        %v654 = vpop.f32.mrb[0].mxu0
        %v655 = vpop.f32.mrb[0].mxu0
        %v656 = vpop.f32.mrb[0].mxu0
        %657 = vdwg.mxu0
        %v658 = vstv %s421
        %v659 = vadd.s32 %v390, %v658
        %v660 = vstv %s401
        %vm661 = vcmp.lt.s32.totalorder %v659, %v660
        %v662 = vsel %vm661, 1, 0
        %v663 = vcvt.s32.f32 %v662
        %v664 = vmul.f32 %v653, 1.442695
        %v665 = vpow.pop %v664
        %v666 = vmul.f32 %v665, %v663
        %v667 = vld [vmem:[#allocation7] sm:$0xff]
        %v668 = vmul.f32 %v666, %v547
        %v669 = vadd.f32 %v667, %v668
        %670 = vst [vmem:[#allocation7] sm:$0xff] %v669
        %v671 = vld [vmem:[#allocation8] sm:$0xff]
        %v672 = vadd.f32 %v671, %v666
        %673 = vst [vmem:[#allocation8] sm:$0xff] %v672
      $region93: #{tpu_custom_call.1} parent=85 // loop_footer
        %s417 = sadd.s32 %s415, 1
      $region94: #{tpu_custom_call.1} parent=85 // loop_footer_branch
        %414 = sbr.rel target = $region90
      $region95: #{tpu_custom_call.1} parent=85 // loop_exit
        _
      %v674 = vld [vmem:[#allocation7] sm:$0xff]
      %v675 = vrot.slane %v674, 4
      %v676 = vadd.f32 %v674, %v675
      %v677 = vrot.slane %v676, 2
      %v678 = vadd.f32 %v676, %v677
      %v679 = vrot.slane %v678, 1
      %v680 = vadd.f32 %v678, %v679
      %s681 = scalar_lea.vmem [#allocation5], %s398
      %682 = vst [vmem:[%s681] sm:$0x1] %v680
      %v683 = vld [vmem:[#allocation8] sm:$0xff]
      %v684 = vrot.slane %v683, 4
      %v685 = vadd.f32 %v683, %v684
      %v686 = vrot.slane %v685, 2
      %v687 = vadd.f32 %v685, %v686
      %v688 = vrot.slane %v687, 1
      %v689 = vadd.f32 %v687, %v688
      %s690 = scalar_lea.vmem [#allocation6], %s398
      %691 = vst [vmem:[%s690] sm:$0x1] %v689
    $region86: #{tpu_custom_call.1} parent=1 // loop_footer
      %s396 = sadd.s32 1, %s392
    $region87: #{tpu_custom_call.1} parent=1 // loop_footer_branch
      %391 = sbr.rel target = $region83
    $region88: #{tpu_custom_call.1} parent=1 // loop_exit
      _
    // Predicated region
    $region96: #{tpu_custom_call.1} parent=1 // pred_check
      %p692 = pneg %p136
    $region97: #{tpu_custom_call.1} parent=1 // pred_check_branch
      %694 = sbr.rel (%p692) target = $region99
    $region98: #{tpu_custom_call.1} parent=1 // pred_region
      %v695 = vld [vmem:[#allocation12] sm:$0xff]
      %v696 = vld [vmem:[#allocation6] sm:$0xff]
      %vm697 = vcmp.gt.f32.partialorder %v696, 0.0
      %v698 = vsel %vm697, %v696, 1.0
      %v699 = vld [vmem:[#allocation5] sm:$0xff]
      %v700 = vrcp.pop %v698
      %v701 = vmul.f32 %v699, %v700
      %v702 = vpack.c.bf16 %v701, %v701
      %v703 = vld [vmem:[#allocation18] sm:$0xf]
      %v704 = vld [vmem:[#allocation18 + $0x4] sm:$0xf]
      %v705 = vld [vmem:[#allocation18 + $0x8] sm:$0xf]
      %v706 = vld [vmem:[#allocation18 + $0xc] sm:$0xf]
      %v707 = vld [vmem:[#allocation18 + $0x10] sm:$0xf]
      %v708 = vld [vmem:[#allocation18 + $0x14] sm:$0xf]
      %v709 = vld [vmem:[#allocation18 + $0x18] sm:$0xf]
      %v710 = vld [vmem:[#allocation18 + $0x1c] sm:$0xf]
      %v711 = vld [vmem:[#allocation18 + $0x20] sm:$0xf]
      %v712 = vld [vmem:[#allocation18 + $0x24] sm:$0xf]
      %v713 = vld [vmem:[#allocation18 + $0x28] sm:$0xf]
      %v714 = vld [vmem:[#allocation18 + $0x2c] sm:$0xf]
      %v715 = vld [vmem:[#allocation18 + $0x30] sm:$0xf]
      %v716 = vld [vmem:[#allocation18 + $0x34] sm:$0xf]
      %v717 = vld [vmem:[#allocation18 + $0x38] sm:$0xf]
      %v718 = vld [vmem:[#allocation18 + $0x3c] sm:$0xf]
      %v719 = vld [vmem:[%s6] sm:$0x1]
      %v721 = vlaneseq
      %v722 = vshrl.u32 %v721, 7
      %v723 = vsub.s32 0, %v722
      %v724 = vrot.slane %v719, %v723
      %v742 = vunpack.c.l.b16 %v703
      %v743 = vunpack.c.l.b16 %v704
      %v744 = vunpack.c.l.b16 %v705
      %v745 = vunpack.c.l.b16 %v706
      %v746 = vunpack.c.l.b16 %v707
      %v747 = vunpack.c.l.b16 %v708
      %v748 = vunpack.c.l.b16 %v709
      %v749 = vunpack.c.l.b16 %v710
      %v750 = vunpack.c.l.b16 %v711
      %v751 = vunpack.c.l.b16 %v712
      %v752 = vunpack.c.l.b16 %v713
      %v753 = vunpack.c.l.b16 %v714
      %v754 = vunpack.c.l.b16 %v715
      %v755 = vunpack.c.l.b16 %v716
      %v756 = vunpack.c.l.b16 %v717
      %v757 = vunpack.c.l.b16 %v718
      %v758 = vpack.c.b16 %v743, %v742
      %v759 = vpack.c.b16 %v745, %v744
      %v760 = vpack.c.b16 %v747, %v746
      %v761 = vpack.c.b16 %v749, %v748
      %v762 = vpack.c.b16 %v751, %v750
      %v763 = vpack.c.b16 %v753, %v752
      %v764 = vpack.c.b16 %v755, %v754
      %v765 = vpack.c.b16 %v757, %v756
      %774 = vmatprep.subr.bf16.mxu0 0
      %775 = vmatpush1.bf16.msra.mxu0 %v758
      %776 = vmatprep.subr.bf16.mxu0 0
      %777 = vmatpush1.bf16.msra.mxu0 %v759
      %778 = vmatprep.subr.bf16.mxu0 0
      %779 = vmatpush1.bf16.msra.mxu0 %v760
      %780 = vmatprep.subr.bf16.mxu0 0
      %781 = vmatpush1.bf16.msra.mxu0 %v761
      %782 = vmatprep.subr.bf16.mxu0 0
      %783 = vmatpush1.bf16.msra.mxu0 %v762
      %784 = vmatprep.subr.bf16.mxu0 0
      %785 = vmatpush1.bf16.msra.mxu0 %v763
      %786 = vmatprep.subr.bf16.mxu0 0
      %787 = vmatpush1.bf16.msra.mxu0 %v764
      %788 = vmatprep.subr.bf16.mxu0 0
      %789 = vmatpush1.bf16.msra.mxu0 %v765
      %790 = vmatprep.subr.bf16.mxu0 0
      %791 = vmatpush1.bf16.msra.mxu0 0
      %792 = vmatprep.subr.bf16.mxu0 0
      %793 = vmatpush1.bf16.msra.mxu0 0
      %794 = vmatprep.subr.bf16.mxu0 0
      %795 = vmatpush1.bf16.msra.mxu0 0
      %796 = vmatprep.subr.bf16.mxu0 0
      %797 = vmatpush1.bf16.msra.mxu0 0
      %798 = vmatprep.subr.bf16.mxu0 0
      %799 = vmatpush1.bf16.msra.mxu0 0
      %800 = vmatprep.subr.bf16.mxu0 0
      %801 = vmatpush1.bf16.msra.mxu0 0
      %802 = vmatprep.subr.bf16.mxu0 0
      %803 = vmatpush1.bf16.msra.mxu0 0
      %804 = vmatprep.subr.bf16.mxu0 0
      %805 = vmatpush1.bf16.msra.mxu0 0
      %806 = vmatprep.mubr.bf16.mxu0 0
      %807 = vmatmul.mubr.bf16.gmra.mrb[0].mxu0 %v702
      %v808 = vpop.f32.mrb[0].mxu0
      %v809 = vadd.f32 %v724, %v808
      %v810 = vpop.f32.mrb[0].mxu0
      %v811 = vpop.f32.mrb[0].mxu0
      %v812 = vpop.f32.mrb[0].mxu0
      %813 = vdwg.mxu0
      %v814 = vadd.f32 %v809, %v695
      %vm815 = vcmp.lt.s32.totalorder %v390, 8
      %v816 = vsel %vm815, 1, 0
      %v817 = vcvt.s32.f32 %v816
      %v818 = vmul.f32 %v814, %v817
      %v819 = vrot.slane %v818, 4
      %v820 = vadd.f32 %v818, %v819
      %v821 = vrot.slane %v820, 2
      %v822 = vadd.f32 %v820, %v821
      %v823 = vrot.slane %v822, 1
      %v824 = vadd.f32 %v822, %v823
      %v825 = vmul.f32 %v824, 0.125
      %v826 = vsub.f32 %v814, %v825
      %v827 = vmul.f32 %v826, %v817
      %v828 = vmul.f32 %v827, %v827
      %v829 = vrot.slane %v828, 4
      %v830 = vadd.f32 %v828, %v829
      %v831 = vrot.slane %v830, 2
      %v832 = vadd.f32 %v830, %v831
      %v833 = vrot.slane %v832, 1
      %v834 = vadd.f32 %v832, %v833
      %v835 = vmul.f32 %v834, 0.125
      %v836 = vadd.f32 %v835, 1e-05
      %v837 = vrsqrt.pop %v836
      %v838 = vmul.f32 %v826, %v837
      %v839 = vld [vmem:[%s7] sm:$0x1]
      %v841 = vlaneseq
      %v842 = vshrl.u32 %v841, 7
      %v843 = vsub.s32 0, %v842
      %v844 = vrot.slane %v839, %v843
      %v846 = vmul.f32 %v838, %v844
      %v847 = vld [vmem:[%s8] sm:$0x1]
      %v849 = vlaneseq
      %v850 = vshrl.u32 %v849, 7
      %v851 = vsub.s32 0, %v850
      %v852 = vrot.slane %v847, %v851
      %v854 = vadd.f32 %v846, %v852
      %v855 = vpack.c.bf16 %v854, %v854
      %v856 = vld [vmem:[#allocation20] sm:$0xf]
      %v857 = vld [vmem:[#allocation20 + $0x4] sm:$0xf]
      %v858 = vld [vmem:[#allocation20 + $0x8] sm:$0xf]
      %v859 = vld [vmem:[#allocation20 + $0xc] sm:$0xf]
      %v860 = vld [vmem:[#allocation20 + $0x10] sm:$0xf]
      %v861 = vld [vmem:[#allocation20 + $0x14] sm:$0xf]
      %v862 = vld [vmem:[#allocation20 + $0x18] sm:$0xf]
      %v863 = vld [vmem:[#allocation20 + $0x1c] sm:$0xf]
      %v864 = vld [vmem:[#allocation20 + $0x20] sm:$0xf]
      %v865 = vld [vmem:[#allocation20 + $0x24] sm:$0xf]
      %v866 = vld [vmem:[#allocation20 + $0x28] sm:$0xf]
      %v867 = vld [vmem:[#allocation20 + $0x2c] sm:$0xf]
      %v868 = vld [vmem:[#allocation20 + $0x30] sm:$0xf]
      %v869 = vld [vmem:[#allocation20 + $0x34] sm:$0xf]
      %v870 = vld [vmem:[#allocation20 + $0x38] sm:$0xf]
      %v871 = vld [vmem:[#allocation20 + $0x3c] sm:$0xf]
      %v872 = vld [vmem:[%s10] sm:$0x1]
      %v874 = vlaneseq
      %v875 = vshrl.u32 %v874, 7
      %v876 = vsub.s32 0, %v875
      %v877 = vrot.slane %v872, %v876
      %v895 = vunpack.c.l.b16 %v856
      %v896 = vunpack.c.l.b16 %v857
      %v897 = vunpack.c.l.b16 %v858
      %v898 = vunpack.c.l.b16 %v859
      %v899 = vunpack.c.l.b16 %v860
      %v900 = vunpack.c.l.b16 %v861
      %v901 = vunpack.c.l.b16 %v862
      %v902 = vunpack.c.l.b16 %v863
      %v903 = vunpack.c.l.b16 %v864
      %v904 = vunpack.c.l.b16 %v865
      %v905 = vunpack.c.l.b16 %v866
      %v906 = vunpack.c.l.b16 %v867
      %v907 = vunpack.c.l.b16 %v868
      %v908 = vunpack.c.l.b16 %v869
      %v909 = vunpack.c.l.b16 %v870
      %v910 = vunpack.c.l.b16 %v871
      %v911 = vpack.c.b16 %v896, %v895
      %v912 = vpack.c.b16 %v898, %v897
      %v913 = vpack.c.b16 %v900, %v899
      %v914 = vpack.c.b16 %v902, %v901
      %v915 = vpack.c.b16 %v904, %v903
      %v916 = vpack.c.b16 %v906, %v905
      %v917 = vpack.c.b16 %v908, %v907
      %v918 = vpack.c.b16 %v910, %v909
      %927 = vmatprep.subr.bf16.mxu0 0
      %928 = vmatpush1.bf16.msra.mxu0 %v911
      %929 = vmatprep.subr.bf16.mxu0 0
      %930 = vmatpush1.bf16.msra.mxu0 %v912
      %931 = vmatprep.subr.bf16.mxu0 0
      %932 = vmatpush1.bf16.msra.mxu0 %v913
      %933 = vmatprep.subr.bf16.mxu0 0
      %934 = vmatpush1.bf16.msra.mxu0 %v914
      %935 = vmatprep.subr.bf16.mxu0 0
      %936 = vmatpush1.bf16.msra.mxu0 %v915
      %937 = vmatprep.subr.bf16.mxu0 0
      %938 = vmatpush1.bf16.msra.mxu0 %v916
      %939 = vmatprep.subr.bf16.mxu0 0
      %940 = vmatpush1.bf16.msra.mxu0 %v917
      %941 = vmatprep.subr.bf16.mxu0 0
      %942 = vmatpush1.bf16.msra.mxu0 %v918
      %943 = vmatprep.subr.bf16.mxu0 0
      %944 = vmatpush1.bf16.msra.mxu0 0
      %945 = vmatprep.subr.bf16.mxu0 0
      %946 = vmatpush1.bf16.msra.mxu0 0
      %947 = vmatprep.subr.bf16.mxu0 0
      %948 = vmatpush1.bf16.msra.mxu0 0
      %949 = vmatprep.subr.bf16.mxu0 0
      %950 = vmatpush1.bf16.msra.mxu0 0
      %951 = vmatprep.subr.bf16.mxu0 0
      %952 = vmatpush1.bf16.msra.mxu0 0
      %953 = vmatprep.subr.bf16.mxu0 0
      %954 = vmatpush1.bf16.msra.mxu0 0
      %955 = vmatprep.subr.bf16.mxu0 0
      %956 = vmatpush1.bf16.msra.mxu0 0
      %957 = vmatprep.subr.bf16.mxu0 0
      %958 = vmatpush1.bf16.msra.mxu0 0
      %959 = vmatprep.mubr.bf16.mxu0 0
      %960 = vmatmul.mubr.bf16.gmra.mrb[0].mxu0 %v855
      %v961 = vpop.f32.mrb[0].mxu0
      %v962 = vadd.f32 %v877, %v961
      %v963 = vpop.f32.mrb[0].mxu0
      %v964 = vpop.f32.mrb[0].mxu0
      %v965 = vpop.f32.mrb[0].mxu0
      %966 = vdwg.mxu0
      %v967 = vmax.f32 %v962, 0.0
      %v968 = vpack.c.bf16 %v967, %v967
      %v969 = vld [vmem:[#allocation21] sm:$0xf]
      %v970 = vld [vmem:[#allocation21 + $0x4] sm:$0xf]
      %v971 = vld [vmem:[#allocation21 + $0x8] sm:$0xf]
      %v972 = vld [vmem:[#allocation21 + $0xc] sm:$0xf]
      %v973 = vld [vmem:[#allocation21 + $0x10] sm:$0xf]
      %v974 = vld [vmem:[#allocation21 + $0x14] sm:$0xf]
      %v975 = vld [vmem:[#allocation21 + $0x18] sm:$0xf]
      %v976 = vld [vmem:[#allocation21 + $0x1c] sm:$0xf]
      %v977 = vld [vmem:[#allocation21 + $0x20] sm:$0xf]
      %v978 = vld [vmem:[#allocation21 + $0x24] sm:$0xf]
      %v979 = vld [vmem:[#allocation21 + $0x28] sm:$0xf]
      %v980 = vld [vmem:[#allocation21 + $0x2c] sm:$0xf]
      %v981 = vld [vmem:[#allocation21 + $0x30] sm:$0xf]
      %v982 = vld [vmem:[#allocation21 + $0x34] sm:$0xf]
      %v983 = vld [vmem:[#allocation21 + $0x38] sm:$0xf]
      %v984 = vld [vmem:[#allocation21 + $0x3c] sm:$0xf]
      %v985 = vld [vmem:[%s12] sm:$0x1]
      %v987 = vlaneseq
      %v988 = vshrl.u32 %v987, 7
      %v989 = vsub.s32 0, %v988
      %v990 = vrot.slane %v985, %v989
      %v1008 = vunpack.c.l.b16 %v969
      %v1009 = vunpack.c.l.b16 %v970
      %v1010 = vunpack.c.l.b16 %v971
      %v1011 = vunpack.c.l.b16 %v972
      %v1012 = vunpack.c.l.b16 %v973
      %v1013 = vunpack.c.l.b16 %v974
      %v1014 = vunpack.c.l.b16 %v975
      %v1015 = vunpack.c.l.b16 %v976
      %v1016 = vunpack.c.l.b16 %v977
      %v1017 = vunpack.c.l.b16 %v978
      %v1018 = vunpack.c.l.b16 %v979
      %v1019 = vunpack.c.l.b16 %v980
      %v1020 = vunpack.c.l.b16 %v981
      %v1021 = vunpack.c.l.b16 %v982
      %v1022 = vunpack.c.l.b16 %v983
      %v1023 = vunpack.c.l.b16 %v984
      %v1024 = vpack.c.b16 %v1009, %v1008
      %v1025 = vpack.c.b16 %v1011, %v1010
      %v1026 = vpack.c.b16 %v1013, %v1012
      %v1027 = vpack.c.b16 %v1015, %v1014
      %v1028 = vpack.c.b16 %v1017, %v1016
      %v1029 = vpack.c.b16 %v1019, %v1018
      %v1030 = vpack.c.b16 %v1021, %v1020
      %v1031 = vpack.c.b16 %v1023, %v1022
      %1040 = vmatprep.subr.bf16.mxu0 0
      %1041 = vmatpush1.bf16.msra.mxu0 %v1024
      %1042 = vmatprep.subr.bf16.mxu0 0
      %1043 = vmatpush1.bf16.msra.mxu0 %v1025
      %1044 = vmatprep.subr.bf16.mxu0 0
      %1045 = vmatpush1.bf16.msra.mxu0 %v1026
      %1046 = vmatprep.subr.bf16.mxu0 0
      %1047 = vmatpush1.bf16.msra.mxu0 %v1027
      %1048 = vmatprep.subr.bf16.mxu0 0
      %1049 = vmatpush1.bf16.msra.mxu0 %v1028
      %1050 = vmatprep.subr.bf16.mxu0 0
      %1051 = vmatpush1.bf16.msra.mxu0 %v1029
      %1052 = vmatprep.subr.bf16.mxu0 0
      %1053 = vmatpush1.bf16.msra.mxu0 %v1030
      %1054 = vmatprep.subr.bf16.mxu0 0
      %1055 = vmatpush1.bf16.msra.mxu0 %v1031
      %1056 = vmatprep.subr.bf16.mxu0 0
      %1057 = vmatpush1.bf16.msra.mxu0 0
      %1058 = vmatprep.subr.bf16.mxu0 0
      %1059 = vmatpush1.bf16.msra.mxu0 0
      %1060 = vmatprep.subr.bf16.mxu0 0
      %1061 = vmatpush1.bf16.msra.mxu0 0
      %1062 = vmatprep.subr.bf16.mxu0 0
      %1063 = vmatpush1.bf16.msra.mxu0 0
      %1064 = vmatprep.subr.bf16.mxu0 0
      %1065 = vmatpush1.bf16.msra.mxu0 0
      %1066 = vmatprep.subr.bf16.mxu0 0
      %1067 = vmatpush1.bf16.msra.mxu0 0
      %1068 = vmatprep.subr.bf16.mxu0 0
      %1069 = vmatpush1.bf16.msra.mxu0 0
      %1070 = vmatprep.subr.bf16.mxu0 0
      %1071 = vmatpush1.bf16.msra.mxu0 0
      %1072 = vmatprep.mubr.bf16.mxu0 0
      %1073 = vmatmul.mubr.bf16.gmra.mrb[0].mxu0 %v968
      %v1074 = vpop.f32.mrb[0].mxu0
      %v1075 = vadd.f32 %v990, %v1074
      %v1076 = vpop.f32.mrb[0].mxu0
      %v1077 = vpop.f32.mrb[0].mxu0
      %v1078 = vpop.f32.mrb[0].mxu0
      %1079 = vdwg.mxu0
      %v1080 = vadd.f32 %v1075, %v854
      %v1081 = vmul.f32 %v1080, %v817
      %v1082 = vrot.slane %v1081, 4
      %v1083 = vadd.f32 %v1081, %v1082
      %v1084 = vrot.slane %v1083, 2
      %v1085 = vadd.f32 %v1083, %v1084
      %v1086 = vrot.slane %v1085, 1
      %v1087 = vadd.f32 %v1085, %v1086
      %v1088 = vmul.f32 %v1087, 0.125
      %v1089 = vsub.f32 %v1080, %v1088
      %v1090 = vmul.f32 %v1089, %v817
      %v1091 = vmul.f32 %v1090, %v1090
      %v1092 = vrot.slane %v1091, 4
      %v1093 = vadd.f32 %v1091, %v1092
      %v1094 = vrot.slane %v1093, 2
      %v1095 = vadd.f32 %v1093, %v1094
      %v1096 = vrot.slane %v1095, 1
      %v1097 = vadd.f32 %v1095, %v1096
      %v1098 = vmul.f32 %v1097, 0.125
      %v1099 = vadd.f32 %v1098, 1e-05
      %v1100 = vrsqrt.pop %v1099
      %v1101 = vmul.f32 %v1089, %v1100
      %v1102 = vld [vmem:[%s13] sm:$0x1]
      %v1104 = vlaneseq
      %v1105 = vshrl.u32 %v1104, 7
      %v1106 = vsub.s32 0, %v1105
      %v1107 = vrot.slane %v1102, %v1106
      %v1109 = vmul.f32 %v1101, %v1107
      %v1110 = vld [vmem:[%s14] sm:$0x1]
      %v1112 = vlaneseq
      %v1113 = vshrl.u32 %v1112, 7
      %v1114 = vsub.s32 0, %v1113
      %v1115 = vrot.slane %v1110, %v1114
      %v1117 = vadd.f32 %v1109, %v1115
      %1118 = vst [vmem:[#allocation23] sm:$0xff] %v1117
    $region99: #{tpu_custom_call.1} parent=1 // pred_fallthru
      _
    // Predicated region
    $region100: #{tpu_custom_call.1} parent=1 // pred_check
      _
    $region101: #{tpu_custom_call.1} parent=1 // pred_check_branch
      %1120 = sbr.rel (0) target = $region103
    $region102: #{tpu_custom_call.1} parent=1 // pred_region
      %s1122 = ssub.s32 128, 128
      %1123 = vsyncadd [#allocation14], %s1122
      %s1125 = sshll.u32 [#allocation23], 4
      %s1126 = int_to_ptr.vmem [resolvable:$true] %s1125
      %1128 = dma.vmem_to_hbm [thread:$0]  %s1126, 128, %s15, [#allocation14]
    $region103: #{tpu_custom_call.1} parent=1 // pred_fallthru
      _
    // Predicated region
    $region104: #{tpu_custom_call.1} parent=1 // pred_check
      _
    $region105: #{tpu_custom_call.1} parent=1 // pred_check_branch
      %1130 = sbr.rel (0) target = $region107
    $region106: #{tpu_custom_call.1} parent=1 // pred_region
      %1131 = dma.done [#allocation14], 128
    $region107: #{tpu_custom_call.1} parent=1 // pred_fallthru
      _
    %1132 = vsyncpa [#allocation13], 1
    %1133 = vsyncpa [#allocation16], 1
    %1134 = vsyncpa [#allocation19], 1
    %1135 = vsyncpa [#allocation22], 1
    %1136 = vsyncpa [#allocation14], 1

</llo_original>
